<compile_context>
chip_gen: v7x
topology: tpu7x:2x2x1
jax: 0.10.0
libtpu: 0.0.40
codegen_flags: <defaults>
</compile_context>

<pallas_src>
import jax
import jax.numpy as jnp
from jax.experimental import pallas as pl
from jax.experimental.pallas import tpu as pltpu

# ---- small synthetic config (stand-in for size=(288,800), backbone='50') ----
# Real model: C_FEA=2048, (H,W)=(9,25), pool->8 channels => FLAT=1800,
#             HIDDEN=2048 (tile 512-1024), cls_dim=(37,10,4) => TOTAL=1480.
N = 4                     # batch
C_FEA = 64                # backbone layer4 channels   (stand-in for 2048)
H, W = 4, 8               # fea spatial                (stand-in for 9, 25)
HW = H * W
POOL_C = 8                # pool conv output channels  (same as original)
FLAT = POOL_C * HW        # flattened dim              (stand-in for 1800)
HIDDEN = 256              # cls hidden                 (stand-in for 2048)
TILE_HID = 128            # hidden tile (multiple of 128 lanes)
CLS_DIM = (9, 5, 4)       # stand-in for (37, 10, 4)
TOTAL_DIM = CLS_DIM[0] * CLS_DIM[1] * CLS_DIM[2]


# ------------------------------ fused kernel ---------------------------------
def _head_kernel(fea_ref, pw_ref, pb_ref, w1_ref, b1_ref, w2_ref, b2_ref,
                 o_ref, pooled_ref):
    """One hidden-tile grid step of the fused head (whole batch per block).

    fea_ref:    (BN, C, HW)       bf16  (constant index map -> loaded once)
    pw_ref:     (POOL_C, C)       bf16
    pb_ref:     (POOL_C, 1)       f32
    w1_ref:     (FLAT, th)        bf16  (hidden tile k of Linear(FLAT, HIDDEN))
    b1_ref:     (1, th)           f32
    w2_ref:     (th, TOTAL)       bf16
    b2_ref:     (1, TOTAL)        f32
    o_ref:      (BN, TOTAL)       f32   (same block across k -> accumulator)
    pooled_ref: (BN, FLAT)        f32 scratch, torch's view(-1, 8*H*W) layout
    """
    k = pl.program_id(0)
    bn, _, hw = fea_ref.shape
    pool_c = pw_ref.shape[0]

    @pl.when(k == 0)
    def _():
        # 1x1 conv directly in NCHW, once per call: (8, C) @ (C, HW) + b per
        # image, then scatter rows channel-major into the flat scratch so its
        # row-major layout reproduces torch's view(-1, 8*H*W).  All slice
        # offsets are static; this prologue runs once per pallas_call.
        for i in range(bn):
            p = jnp.dot(pw_ref[...], fea_ref[i],
                        preferred_element_type=jnp.float32) + pb_ref[...]
            for cc in range(pool_c):
                pooled_ref[i:i + 1, cc * hw:(cc + 1) * hw] = p[cc:cc + 1, :]
        # Initialize the resident output block with the final-layer bias.
        o_ref[...] = jnp.broadcast_to(b2_ref[...], o_ref.shape)

    # Linear(FLAT, HIDDEN) restricted to hidden tile k, batched over images:
    # one K=FLAT contraction instead of 8 per-channel M=1 dots.
    flat = pooled_ref[...].astype(jnp.bfloat16)               # (BN, FLAT)
    h = jnp.dot(flat, w1_ref[...],
                preferred_element_type=jnp.float32) + b1_ref[...]
    h = jnp.maximum(h, 0.0).astype(jnp.bfloat16)              # ReLU, (BN, th)

    # Second Linear: accumulate this hidden tile's partial product directly
    # into the resident output block.
    o_ref[...] += jnp.dot(h, w2_ref[...], preferred_element_type=jnp.float32)


# ------------------------- forward (use_aux=False) ----------------------------
def parsing_net_forward(fea, params, *, tile_hid=TILE_HID):
    """parsingNet.forward (use_aux=False) given the backbone output `fea`.

    fea: (N, C_FEA, H, W) float32.  Returns group_cls: (N, *CLS_DIM) float32.
    """
    n, c, h, w = fea.shape
    hw = h * w
    flat = POOL_C * hw
    hidden = params["w1"].shape[1]
    total = params["w2"].shape[1]
    assert hidden % tile_hid == 0, "tile_hid must divide HIDDEN"
    k_hid = hidden // tile_hid

    # Free reshape (keeps NCHW); bf16 halves the activation DMA.
    fea_r = fea.reshape(n, c, hw).astype(jnp.bfloat16)

    out = pl.pallas_call(
        _head_kernel,
        out_shape=jax.ShapeDtypeStruct((n, total), jnp.float32),
        grid_spec=pltpu.PrefetchScalarGridSpec(
            num_scalar_prefetch=0,
            grid=(k_hid,),                      # hidden tiles only; weights
            in_specs=[                          # stream exactly once per call
                pl.BlockSpec((n, c, hw), lambda k: (0, 0, 0)),
                pl.BlockSpec((POOL_C, c), lambda k: (0, 0)),
                pl.BlockSpec((POOL_C, 1), lambda k: (0, 0)),
                pl.BlockSpec((flat, tile_hid), lambda k: (0, k)),   # 2-D w1
                pl.BlockSpec((1, tile_hid), lambda k: (0, k)),
                pl.BlockSpec((tile_hid, total), lambda k: (k, 0)),
                pl.BlockSpec((1, total), lambda k: (0, 0)),
            ],
            out_specs=pl.BlockSpec((n, total), lambda k: (0, 0)),
            scratch_shapes=[
                pltpu.VMEM((n, flat), jnp.float32),   # pooled / "flat" buffer
            ],
        ),
        compiler_params=pltpu.CompilerParams(
            # Single reduction axis; batch is inside the block, so no reliance
            # on megacore batch-splitting for this weight-bound head.
            dimension_semantics=("arbitrary",),
            # Demo footprint is <1 MiB; real dims at tile_hid<=1024 with bf16
            # weights/fea stay ~20 MiB, well under v7x's 64 MiB/TC.
            vmem_limit_bytes=32 * 1024 * 1024,
        ),
    )(fea_r, params["pool_w"], params["pool_b"], params["w1"],
      params["b1"], params["w2"], params["b2"])

    return out.reshape(n, *CLS_DIM)


def _reference_forward(fea, params):
    """Pure-JAX reference, mimicking the kernel's bf16 rounding points."""
    n, c, h, w = fea.shape
    hw = h * w
    fea_r = fea.reshape(n, c, hw).astype(jnp.bfloat16).astype(jnp.float32)
    pw = params["pool_w"].astype(jnp.float32)
    pooled = jnp.einsum("pc,ncs->nps", pw, fea_r) + params["pool_b"][None]
    flat = pooled.reshape(n, POOL_C * hw)               # torch's view(-1, 1800)
    flat = flat.astype(jnp.bfloat16).astype(jnp.float32)
    w1 = params["w1"].astype(jnp.float32)
    h1 = jnp.maximum(flat @ w1 + params["b1"], 0.0)
    h1 = h1.astype(jnp.bfloat16).astype(jnp.float32)
    w2 = params["w2"].astype(jnp.float32)
    out = h1 @ w2 + params["b2"]
    return out.reshape(n, *CLS_DIM)


if __name__ == "__main__":
    key = jax.random.PRNGKey(0)
    k = jax.random.split(key, 7)
    fea = jax.random.normal(k[0], (N, C_FEA, H, W), jnp.float32)
    params = {
        # torch Conv2d(C_FEA, 8, 1).weight is (8, C_FEA, 1, 1) -> (8, C_FEA).
        "pool_w": (jax.random.normal(k[1], (POOL_C, C_FEA), jnp.float32) * 0.05
                   ).astype(jnp.bfloat16),
        "pool_b": jax.random.normal(k[2], (POOL_C, 1), jnp.float32) * 0.05,
        # torch Linear(in, out).weight is (out, in); stored transposed (in, out).
        "w1": (jax.random.normal(k[3], (FLAT, HIDDEN), jnp.float32) * 0.02
               ).astype(jnp.bfloat16),
        "b1": jax.random.normal(k[4], (1, HIDDEN), jnp.float32) * 0.02,
        "w2": (jax.random.normal(k[5], (HIDDEN, TOTAL_DIM), jnp.float32) * 0.02
               ).astype(jnp.bfloat16),
        "b2": jax.random.normal(k[6], (1, TOTAL_DIM), jnp.float32) * 0.02,
    }

    out = jax.jit(parsing_net_forward)(fea, params)
    jax.block_until_ready(out)

    ref = _reference_forward(fea, params)
    assert out.shape == (N,) + CLS_DIM, out.shape
    assert jnp.allclose(out, ref, atol=1e-2, rtol=1e-2), float(
        jnp.max(jnp.abs(out - ref)))

    print("KERNEL_OK")
</pallas_src>

<mosaic_0001>
module attributes {stable_mosaic.version = 11 : i64} {
  func.func @_head_kernel(%arg0: i32, %arg1: memref<4x64x32xbf16, #tpu.memory_space<vmem>>, %arg2: memref<8x64xbf16, #tpu.memory_space<vmem>>, %arg3: memref<8x1xf32, #tpu.memory_space<vmem>>, %arg4: memref<256x128xbf16, #tpu.memory_space<vmem>>, %arg5: memref<1x128xf32, #tpu.memory_space<vmem>>, %arg6: memref<128x180xbf16, #tpu.memory_space<vmem>>, %arg7: memref<1x180xf32, #tpu.memory_space<vmem>>, %arg8: memref<4x180xf32, #tpu.memory_space<vmem>>, %arg9: memref<4x256xf32, #tpu.memory_space<vmem>>) attributes {dimension_semantics = [#tpu.dimension_semantics<arbitrary>], iteration_bounds = array<i64: 2>, scalar_prefetch = 0 : i64, scratch_operands = 1 : i64, tpu.core_type = #tpu.core_type<tc>, window_params = [{pipeline_mode = #tpu.pipeline_mode<synchronous>, transform_indices = @transform_0, window_bounds = array<i64: 4, 64, 32>}, {pipeline_mode = #tpu.pipeline_mode<synchronous>, transform_indices = @transform_1, window_bounds = array<i64: 8, 64>}, {pipeline_mode = #tpu.pipeline_mode<synchronous>, transform_indices = @transform_2, window_bounds = array<i64: 8, 1>}, {transform_indices = @transform_3, window_bounds = array<i64: 256, 128>}, {transform_indices = @transform_4, window_bounds = array<i64: 1, 128>}, {transform_indices = @transform_5, window_bounds = array<i64: 128, 180>}, {pipeline_mode = #tpu.pipeline_mode<synchronous>, transform_indices = @transform_6, window_bounds = array<i64: 1, 180>}, {pipeline_mode = #tpu.pipeline_mode<synchronous>, transform_indices = @transform_7, window_bounds = array<i64: 4, 180>}]} {
    %c0_i32 = arith.constant 0 : i32
    %0 = arith.cmpi eq, %arg0, %c0_i32 : i32
    %1 = arith.extui %0 : i1 to i32
    %c0_i32_0 = arith.constant 0 : i32
    %2 = arith.cmpi ne, %1, %c0_i32_0 : i32
    scf.if %2 {
      %c0_14 = arith.constant 0 : index
      %c0_15 = arith.constant 0 : index
      %18 = vector.load %arg2[%c0_14, %c0_15] : memref<8x64xbf16, #tpu.memory_space<vmem>>, vector<8x64xbf16>
      %c0_16 = arith.constant 0 : index
      %c0_17 = arith.constant 0 : index
      %c0_18 = arith.constant 0 : index
      %19 = vector.load %arg1[%c0_16, %c0_17, %c0_18] : memref<4x64x32xbf16, #tpu.memory_space<vmem>>, vector<1x64x32xbf16>
      %20 = vector.shape_cast %19 : vector<1x64x32xbf16> to vector<64x32xbf16>
      %cst_19 = arith.constant dense<0.000000e+00> : vector<8x32xf32>
      %21 = tpu.matmul %18, %20, %cst_19 {dimension_numbers = #tpu.dot_dimension_numbers<[1], [0], [0], [1], [0, 0, 1, 1], [], []>} : vector<8x64xbf16>, vector<64x32xbf16>, vector<8x32xf32> -> vector<8x32xf32>
      %c0_20 = arith.constant 0 : index
      %c0_21 = arith.constant 0 : index
      %22 = vector.load %arg3[%c0_20, %c0_21] : memref<8x1xf32, #tpu.memory_space<vmem>>, vector<8x1xf32>
      %23 = vector.broadcast %22 : vector<8x1xf32> to vector<8x32xf32>
      %24 = arith.addf %21, %23 : vector<8x32xf32>
      %25 = vector.extract_strided_slice %24 {offsets = [0, 0], sizes = [1, 32], strides = [1, 1]} : vector<8x32xf32> to vector<1x32xf32>
      %c0_22 = arith.constant 0 : index
      %c0_23 = arith.constant 0 : index
      %26 = vector.load %arg9[%c0_22, %c0_23] : memref<4x256xf32, #tpu.memory_space<vmem>>, vector<1x32xf32>
      tpu.vector_store %arg9[%c0_22, %c0_23], %25 {strides = array<i32>} : memref<4x256xf32, #tpu.memory_space<vmem>>, vector<1x32xf32>,
      %27 = vector.extract_strided_slice %24 {offsets = [1, 0], sizes = [1, 32], strides = [1, 1]} : vector<8x32xf32> to vector<1x32xf32>
      %c0_24 = arith.constant 0 : index
      %c32 = arith.constant 32 : index
      %28 = vector.load %arg9[%c0_24, %c32] : memref<4x256xf32, #tpu.memory_space<vmem>>, vector<1x32xf32>
      tpu.vector_store %arg9[%c0_24, %c32], %27 {strides = array<i32>} : memref<4x256xf32, #tpu.memory_space<vmem>>, vector<1x32xf32>,
      %29 = vector.extract_strided_slice %24 {offsets = [2, 0], sizes = [1, 32], strides = [1, 1]} : vector<8x32xf32> to vector<1x32xf32>
      %c0_25 = arith.constant 0 : index
      %c64 = arith.constant 64 : index
      %30 = vector.load %arg9[%c0_25, %c64] : memref<4x256xf32, #tpu.memory_space<vmem>>, vector<1x32xf32>
      tpu.vector_store %arg9[%c0_25, %c64], %29 {strides = array<i32>} : memref<4x256xf32, #tpu.memory_space<vmem>>, vector<1x32xf32>,
      %31 = vector.extract_strided_slice %24 {offsets = [3, 0], sizes = [1, 32], strides = [1, 1]} : vector<8x32xf32> to vector<1x32xf32>
      %c0_26 = arith.constant 0 : index
      %c96 = arith.constant 96 : index
      %32 = vector.load %arg9[%c0_26, %c96] : memref<4x256xf32, #tpu.memory_space<vmem>>, vector<1x32xf32>
      tpu.vector_store %arg9[%c0_26, %c96], %31 {strides = array<i32>} : memref<4x256xf32, #tpu.memory_space<vmem>>, vector<1x32xf32>,
      %33 = vector.extract_strided_slice %24 {offsets = [4, 0], sizes = [1, 32], strides = [1, 1]} : vector<8x32xf32> to vector<1x32xf32>
      %c0_27 = arith.constant 0 : index
      %c128 = arith.constant 128 : index
      %34 = vector.load %arg9[%c0_27, %c128] : memref<4x256xf32, #tpu.memory_space<vmem>>, vector<1x32xf32>
      tpu.vector_store %arg9[%c0_27, %c128], %33 {strides = array<i32>} : memref<4x256xf32, #tpu.memory_space<vmem>>, vector<1x32xf32>,
      %35 = vector.extract_strided_slice %24 {offsets = [5, 0], sizes = [1, 32], strides = [1, 1]} : vector<8x32xf32> to vector<1x32xf32>
      %c0_28 = arith.constant 0 : index
      %c160 = arith.constant 160 : index
      %36 = vector.load %arg9[%c0_28, %c160] : memref<4x256xf32, #tpu.memory_space<vmem>>, vector<1x32xf32>
      tpu.vector_store %arg9[%c0_28, %c160], %35 {strides = array<i32>} : memref<4x256xf32, #tpu.memory_space<vmem>>, vector<1x32xf32>,
      %37 = vector.extract_strided_slice %24 {offsets = [6, 0], sizes = [1, 32], strides = [1, 1]} : vector<8x32xf32> to vector<1x32xf32>
      %c0_29 = arith.constant 0 : index
      %c192 = arith.constant 192 : index
      %38 = vector.load %arg9[%c0_29, %c192] : memref<4x256xf32, #tpu.memory_space<vmem>>, vector<1x32xf32>
      tpu.vector_store %arg9[%c0_29, %c192], %37 {strides = array<i32>} : memref<4x256xf32, #tpu.memory_space<vmem>>, vector<1x32xf32>,
      %39 = vector.extract_strided_slice %24 {offsets = [7, 0], sizes = [1, 32], strides = [1, 1]} : vector<8x32xf32> to vector<1x32xf32>
      %c0_30 = arith.constant 0 : index
      %c224 = arith.constant 224 : index
      %40 = vector.load %arg9[%c0_30, %c224] : memref<4x256xf32, #tpu.memory_space<vmem>>, vector<1x32xf32>
      tpu.vector_store %arg9[%c0_30, %c224], %39 {strides = array<i32>} : memref<4x256xf32, #tpu.memory_space<vmem>>, vector<1x32xf32>,
      %c0_31 = arith.constant 0 : index
      %c0_32 = arith.constant 0 : index
      %41 = vector.load %arg2[%c0_31, %c0_32] : memref<8x64xbf16, #tpu.memory_space<vmem>>, vector<8x64xbf16>
      %c1 = arith.constant 1 : index
      %c0_33 = arith.constant 0 : index
      %c0_34 = arith.constant 0 : index
      %42 = vector.load %arg1[%c1, %c0_33, %c0_34] : memref<4x64x32xbf16, #tpu.memory_space<vmem>>, vector<1x64x32xbf16>
      %43 = vector.shape_cast %42 : vector<1x64x32xbf16> to vector<64x32xbf16>
      %cst_35 = arith.constant dense<0.000000e+00> : vector<8x32xf32>
      %44 = tpu.matmul %41, %43, %cst_35 {dimension_numbers = #tpu.dot_dimension_numbers<[1], [0], [0], [1], [0, 0, 1, 1], [], []>} : vector<8x64xbf16>, vector<64x32xbf16>, vector<8x32xf32> -> vector<8x32xf32>
      %c0_36 = arith.constant 0 : index
      %c0_37 = arith.constant 0 : index
      %45 = vector.load %arg3[%c0_36, %c0_37] : memref<8x1xf32, #tpu.memory_space<vmem>>, vector<8x1xf32>
      %46 = vector.broadcast %45 : vector<8x1xf32> to vector<8x32xf32>
      %47 = arith.addf %44, %46 : vector<8x32xf32>
      %48 = vector.extract_strided_slice %47 {offsets = [0, 0], sizes = [1, 32], strides = [1, 1]} : vector<8x32xf32> to vector<1x32xf32>
      %c1_38 = arith.constant 1 : index
      %c0_39 = arith.constant 0 : index
      %49 = vector.load %arg9[%c1_38, %c0_39] : memref<4x256xf32, #tpu.memory_space<vmem>>, vector<1x32xf32>
      tpu.vector_store %arg9[%c1_38, %c0_39], %48 {strides = array<i32>} : memref<4x256xf32, #tpu.memory_space<vmem>>, vector<1x32xf32>,
      %50 = vector.extract_strided_slice %47 {offsets = [1, 0], sizes = [1, 32], strides = [1, 1]} : vector<8x32xf32> to vector<1x32xf32>
      %c1_40 = arith.constant 1 : index
      %c32_41 = arith.constant 32 : index
      %51 = vector.load %arg9[%c1_40, %c32_41] : memref<4x256xf32, #tpu.memory_space<vmem>>, vector<1x32xf32>
      tpu.vector_store %arg9[%c1_40, %c32_41], %50 {strides = array<i32>} : memref<4x256xf32, #tpu.memory_space<vmem>>, vector<1x32xf32>,
      %52 = vector.extract_strided_slice %47 {offsets = [2, 0], sizes = [1, 32], strides = [1, 1]} : vector<8x32xf32> to vector<1x32xf32>
      %c1_42 = arith.constant 1 : index
      %c64_43 = arith.constant 64 : index
      %53 = vector.load %arg9[%c1_42, %c64_43] : memref<4x256xf32, #tpu.memory_space<vmem>>, vector<1x32xf32>
      tpu.vector_store %arg9[%c1_42, %c64_43], %52 {strides = array<i32>} : memref<4x256xf32, #tpu.memory_space<vmem>>, vector<1x32xf32>,
      %54 = vector.extract_strided_slice %47 {offsets = [3, 0], sizes = [1, 32], strides = [1, 1]} : vector<8x32xf32> to vector<1x32xf32>
      %c1_44 = arith.constant 1 : index
      %c96_45 = arith.constant 96 : index
      %55 = vector.load %arg9[%c1_44, %c96_45] : memref<4x256xf32, #tpu.memory_space<vmem>>, vector<1x32xf32>
      tpu.vector_store %arg9[%c1_44, %c96_45], %54 {strides = array<i32>} : memref<4x256xf32, #tpu.memory_space<vmem>>, vector<1x32xf32>,
      %56 = vector.extract_strided_slice %47 {offsets = [4, 0], sizes = [1, 32], strides = [1, 1]} : vector<8x32xf32> to vector<1x32xf32>
      %c1_46 = arith.constant 1 : index
      %c128_47 = arith.constant 128 : index
      %57 = vector.load %arg9[%c1_46, %c128_47] : memref<4x256xf32, #tpu.memory_space<vmem>>, vector<1x32xf32>
      tpu.vector_store %arg9[%c1_46, %c128_47], %56 {strides = array<i32>} : memref<4x256xf32, #tpu.memory_space<vmem>>, vector<1x32xf32>,
      %58 = vector.extract_strided_slice %47 {offsets = [5, 0], sizes = [1, 32], strides = [1, 1]} : vector<8x32xf32> to vector<1x32xf32>
      %c1_48 = arith.constant 1 : index
      %c160_49 = arith.constant 160 : index
      %59 = vector.load %arg9[%c1_48, %c160_49] : memref<4x256xf32, #tpu.memory_space<vmem>>, vector<1x32xf32>
      tpu.vector_store %arg9[%c1_48, %c160_49], %58 {strides = array<i32>} : memref<4x256xf32, #tpu.memory_space<vmem>>, vector<1x32xf32>,
      %60 = vector.extract_strided_slice %47 {offsets = [6, 0], sizes = [1, 32], strides = [1, 1]} : vector<8x32xf32> to vector<1x32xf32>
      %c1_50 = arith.constant 1 : index
      %c192_51 = arith.constant 192 : index
      %61 = vector.load %arg9[%c1_50, %c192_51] : memref<4x256xf32, #tpu.memory_space<vmem>>, vector<1x32xf32>
      tpu.vector_store %arg9[%c1_50, %c192_51], %60 {strides = array<i32>} : memref<4x256xf32, #tpu.memory_space<vmem>>, vector<1x32xf32>,
      %62 = vector.extract_strided_slice %47 {offsets = [7, 0], sizes = [1, 32], strides = [1, 1]} : vector<8x32xf32> to vector<1x32xf32>
      %c1_52 = arith.constant 1 : index
      %c224_53 = arith.constant 224 : index
      %63 = vector.load %arg9[%c1_52, %c224_53] : memref<4x256xf32, #tpu.memory_space<vmem>>, vector<1x32xf32>
      tpu.vector_store %arg9[%c1_52, %c224_53], %62 {strides = array<i32>} : memref<4x256xf32, #tpu.memory_space<vmem>>, vector<1x32xf32>,
      %c0_54 = arith.constant 0 : index
      %c0_55 = arith.constant 0 : index
      %64 = vector.load %arg2[%c0_54, %c0_55] : memref<8x64xbf16, #tpu.memory_space<vmem>>, vector<8x64xbf16>
      %c2 = arith.constant 2 : index
      %c0_56 = arith.constant 0 : index
      %c0_57 = arith.constant 0 : index
      %65 = vector.load %arg1[%c2, %c0_56, %c0_57] : memref<4x64x32xbf16, #tpu.memory_space<vmem>>, vector<1x64x32xbf16>
      %66 = vector.shape_cast %65 : vector<1x64x32xbf16> to vector<64x32xbf16>
      %cst_58 = arith.constant dense<0.000000e+00> : vector<8x32xf32>
      %67 = tpu.matmul %64, %66, %cst_58 {dimension_numbers = #tpu.dot_dimension_numbers<[1], [0], [0], [1], [0, 0, 1, 1], [], []>} : vector<8x64xbf16>, vector<64x32xbf16>, vector<8x32xf32> -> vector<8x32xf32>
      %c0_59 = arith.constant 0 : index
      %c0_60 = arith.constant 0 : index
      %68 = vector.load %arg3[%c0_59, %c0_60] : memref<8x1xf32, #tpu.memory_space<vmem>>, vector<8x1xf32>
      %69 = vector.broadcast %68 : vector<8x1xf32> to vector<8x32xf32>
      %70 = arith.addf %67, %69 : vector<8x32xf32>
      %71 = vector.extract_strided_slice %70 {offsets = [0, 0], sizes = [1, 32], strides = [1, 1]} : vector<8x32xf32> to vector<1x32xf32>
      %c2_61 = arith.constant 2 : index
      %c0_62 = arith.constant 0 : index
      %72 = vector.load %arg9[%c2_61, %c0_62] : memref<4x256xf32, #tpu.memory_space<vmem>>, vector<1x32xf32>
      tpu.vector_store %arg9[%c2_61, %c0_62], %71 {strides = array<i32>} : memref<4x256xf32, #tpu.memory_space<vmem>>, vector<1x32xf32>,
      %73 = vector.extract_strided_slice %70 {offsets = [1, 0], sizes = [1, 32], strides = [1, 1]} : vector<8x32xf32> to vector<1x32xf32>
      %c2_63 = arith.constant 2 : index
      %c32_64 = arith.constant 32 : index
      %74 = vector.load %arg9[%c2_63, %c32_64] : memref<4x256xf32, #tpu.memory_space<vmem>>, vector<1x32xf32>
      tpu.vector_store %arg9[%c2_63, %c32_64], %73 {strides = array<i32>} : memref<4x256xf32, #tpu.memory_space<vmem>>, vector<1x32xf32>,
      %75 = vector.extract_strided_slice %70 {offsets = [2, 0], sizes = [1, 32], strides = [1, 1]} : vector<8x32xf32> to vector<1x32xf32>
      %c2_65 = arith.constant 2 : index
      %c64_66 = arith.constant 64 : index
      %76 = vector.load %arg9[%c2_65, %c64_66] : memref<4x256xf32, #tpu.memory_space<vmem>>, vector<1x32xf32>
      tpu.vector_store %arg9[%c2_65, %c64_66], %75 {strides = array<i32>} : memref<4x256xf32, #tpu.memory_space<vmem>>, vector<1x32xf32>,
      %77 = vector.extract_strided_slice %70 {offsets = [3, 0], sizes = [1, 32], strides = [1, 1]} : vector<8x32xf32> to vector<1x32xf32>
      %c2_67 = arith.constant 2 : index
      %c96_68 = arith.constant 96 : index
      %78 = vector.load %arg9[%c2_67, %c96_68] : memref<4x256xf32, #tpu.memory_space<vmem>>, vector<1x32xf32>
      tpu.vector_store %arg9[%c2_67, %c96_68], %77 {strides = array<i32>} : memref<4x256xf32, #tpu.memory_space<vmem>>, vector<1x32xf32>,
      %79 = vector.extract_strided_slice %70 {offsets = [4, 0], sizes = [1, 32], strides = [1, 1]} : vector<8x32xf32> to vector<1x32xf32>
      %c2_69 = arith.constant 2 : index
      %c128_70 = arith.constant 128 : index
      %80 = vector.load %arg9[%c2_69, %c128_70] : memref<4x256xf32, #tpu.memory_space<vmem>>, vector<1x32xf32>
      tpu.vector_store %arg9[%c2_69, %c128_70], %79 {strides = array<i32>} : memref<4x256xf32, #tpu.memory_space<vmem>>, vector<1x32xf32>,
      %81 = vector.extract_strided_slice %70 {offsets = [5, 0], sizes = [1, 32], strides = [1, 1]} : vector<8x32xf32> to vector<1x32xf32>
      %c2_71 = arith.constant 2 : index
      %c160_72 = arith.constant 160 : index
      %82 = vector.load %arg9[%c2_71, %c160_72] : memref<4x256xf32, #tpu.memory_space<vmem>>, vector<1x32xf32>
      tpu.vector_store %arg9[%c2_71, %c160_72], %81 {strides = array<i32>} : memref<4x256xf32, #tpu.memory_space<vmem>>, vector<1x32xf32>,
      %83 = vector.extract_strided_slice %70 {offsets = [6, 0], sizes = [1, 32], strides = [1, 1]} : vector<8x32xf32> to vector<1x32xf32>
      %c2_73 = arith.constant 2 : index
      %c192_74 = arith.constant 192 : index
      %84 = vector.load %arg9[%c2_73, %c192_74] : memref<4x256xf32, #tpu.memory_space<vmem>>, vector<1x32xf32>
      tpu.vector_store %arg9[%c2_73, %c192_74], %83 {strides = array<i32>} : memref<4x256xf32, #tpu.memory_space<vmem>>, vector<1x32xf32>,
      %85 = vector.extract_strided_slice %70 {offsets = [7, 0], sizes = [1, 32], strides = [1, 1]} : vector<8x32xf32> to vector<1x32xf32>
      %c2_75 = arith.constant 2 : index
      %c224_76 = arith.constant 224 : index
      %86 = vector.load %arg9[%c2_75, %c224_76] : memref<4x256xf32, #tpu.memory_space<vmem>>, vector<1x32xf32>
      tpu.vector_store %arg9[%c2_75, %c224_76], %85 {strides = array<i32>} : memref<4x256xf32, #tpu.memory_space<vmem>>, vector<1x32xf32>,
      %c0_77 = arith.constant 0 : index
      %c0_78 = arith.constant 0 : index
      %87 = vector.load %arg2[%c0_77, %c0_78] : memref<8x64xbf16, #tpu.memory_space<vmem>>, vector<8x64xbf16>
      %c3 = arith.constant 3 : index
      %c0_79 = arith.constant 0 : index
      %c0_80 = arith.constant 0 : index
      %88 = vector.load %arg1[%c3, %c0_79, %c0_80] : memref<4x64x32xbf16, #tpu.memory_space<vmem>>, vector<1x64x32xbf16>
      %89 = vector.shape_cast %88 : vector<1x64x32xbf16> to vector<64x32xbf16>
      %cst_81 = arith.constant dense<0.000000e+00> : vector<8x32xf32>
      %90 = tpu.matmul %87, %89, %cst_81 {dimension_numbers = #tpu.dot_dimension_numbers<[1], [0], [0], [1], [0, 0, 1, 1], [], []>} : vector<8x64xbf16>, vector<64x32xbf16>, vector<8x32xf32> -> vector<8x32xf32>
      %c0_82 = arith.constant 0 : index
      %c0_83 = arith.constant 0 : index
      %91 = vector.load %arg3[%c0_82, %c0_83] : memref<8x1xf32, #tpu.memory_space<vmem>>, vector<8x1xf32>
      %92 = vector.broadcast %91 : vector<8x1xf32> to vector<8x32xf32>
      %93 = arith.addf %90, %92 : vector<8x32xf32>
      %94 = vector.extract_strided_slice %93 {offsets = [0, 0], sizes = [1, 32], strides = [1, 1]} : vector<8x32xf32> to vector<1x32xf32>
      %c3_84 = arith.constant 3 : index
      %c0_85 = arith.constant 0 : index
      %95 = vector.load %arg9[%c3_84, %c0_85] : memref<4x256xf32, #tpu.memory_space<vmem>>, vector<1x32xf32>
      tpu.vector_store %arg9[%c3_84, %c0_85], %94 {strides = array<i32>} : memref<4x256xf32, #tpu.memory_space<vmem>>, vector<1x32xf32>,
      %96 = vector.extract_strided_slice %93 {offsets = [1, 0], sizes = [1, 32], strides = [1, 1]} : vector<8x32xf32> to vector<1x32xf32>
      %c3_86 = arith.constant 3 : index
      %c32_87 = arith.constant 32 : index
      %97 = vector.load %arg9[%c3_86, %c32_87] : memref<4x256xf32, #tpu.memory_space<vmem>>, vector<1x32xf32>
      tpu.vector_store %arg9[%c3_86, %c32_87], %96 {strides = array<i32>} : memref<4x256xf32, #tpu.memory_space<vmem>>, vector<1x32xf32>,
      %98 = vector.extract_strided_slice %93 {offsets = [2, 0], sizes = [1, 32], strides = [1, 1]} : vector<8x32xf32> to vector<1x32xf32>
      %c3_88 = arith.constant 3 : index
      %c64_89 = arith.constant 64 : index
      %99 = vector.load %arg9[%c3_88, %c64_89] : memref<4x256xf32, #tpu.memory_space<vmem>>, vector<1x32xf32>
      tpu.vector_store %arg9[%c3_88, %c64_89], %98 {strides = array<i32>} : memref<4x256xf32, #tpu.memory_space<vmem>>, vector<1x32xf32>,
      %100 = vector.extract_strided_slice %93 {offsets = [3, 0], sizes = [1, 32], strides = [1, 1]} : vector<8x32xf32> to vector<1x32xf32>
      %c3_90 = arith.constant 3 : index
      %c96_91 = arith.constant 96 : index
      %101 = vector.load %arg9[%c3_90, %c96_91] : memref<4x256xf32, #tpu.memory_space<vmem>>, vector<1x32xf32>
      tpu.vector_store %arg9[%c3_90, %c96_91], %100 {strides = array<i32>} : memref<4x256xf32, #tpu.memory_space<vmem>>, vector<1x32xf32>,
      %102 = vector.extract_strided_slice %93 {offsets = [4, 0], sizes = [1, 32], strides = [1, 1]} : vector<8x32xf32> to vector<1x32xf32>
      %c3_92 = arith.constant 3 : index
      %c128_93 = arith.constant 128 : index
      %103 = vector.load %arg9[%c3_92, %c128_93] : memref<4x256xf32, #tpu.memory_space<vmem>>, vector<1x32xf32>
      tpu.vector_store %arg9[%c3_92, %c128_93], %102 {strides = array<i32>} : memref<4x256xf32, #tpu.memory_space<vmem>>, vector<1x32xf32>,
      %104 = vector.extract_strided_slice %93 {offsets = [5, 0], sizes = [1, 32], strides = [1, 1]} : vector<8x32xf32> to vector<1x32xf32>
      %c3_94 = arith.constant 3 : index
      %c160_95 = arith.constant 160 : index
      %105 = vector.load %arg9[%c3_94, %c160_95] : memref<4x256xf32, #tpu.memory_space<vmem>>, vector<1x32xf32>
      tpu.vector_store %arg9[%c3_94, %c160_95], %104 {strides = array<i32>} : memref<4x256xf32, #tpu.memory_space<vmem>>, vector<1x32xf32>,
      %106 = vector.extract_strided_slice %93 {offsets = [6, 0], sizes = [1, 32], strides = [1, 1]} : vector<8x32xf32> to vector<1x32xf32>
      %c3_96 = arith.constant 3 : index
      %c192_97 = arith.constant 192 : index
      %107 = vector.load %arg9[%c3_96, %c192_97] : memref<4x256xf32, #tpu.memory_space<vmem>>, vector<1x32xf32>
      tpu.vector_store %arg9[%c3_96, %c192_97], %106 {strides = array<i32>} : memref<4x256xf32, #tpu.memory_space<vmem>>, vector<1x32xf32>,
      %108 = vector.extract_strided_slice %93 {offsets = [7, 0], sizes = [1, 32], strides = [1, 1]} : vector<8x32xf32> to vector<1x32xf32>
      %c3_98 = arith.constant 3 : index
      %c224_99 = arith.constant 224 : index
      %109 = vector.load %arg9[%c3_98, %c224_99] : memref<4x256xf32, #tpu.memory_space<vmem>>, vector<1x32xf32>
      tpu.vector_store %arg9[%c3_98, %c224_99], %108 {strides = array<i32>} : memref<4x256xf32, #tpu.memory_space<vmem>>, vector<1x32xf32>,
      %c0_100 = arith.constant 0 : index
      %c0_101 = arith.constant 0 : index
      %110 = vector.load %arg7[%c0_100, %c0_101] : memref<1x180xf32, #tpu.memory_space<vmem>>, vector<1x180xf32>
      %111 = vector.shape_cast %110 : vector<1x180xf32> to vector<1x180xf32>
      %112 = vector.broadcast %111 : vector<1x180xf32> to vector<4x180xf32>
      %c0_102 = arith.constant 0 : index
      %c0_103 = arith.constant 0 : index
      %113 = vector.load %arg8[%c0_102, %c0_103] : memref<4x180xf32, #tpu.memory_space<vmem>>, vector<4x180xf32>
      tpu.vector_store %arg8[%c0_102, %c0_103], %112 {strides = array<i32>} : memref<4x180xf32, #tpu.memory_space<vmem>>, vector<4x180xf32>,
    } else {
    }
    %c0 = arith.constant 0 : index
    %c0_1 = arith.constant 0 : index
    %3 = vector.load %arg9[%c0, %c0_1] : memref<4x256xf32, #tpu.memory_space<vmem>>, vector<4x256xf32>
    %4 = arith.truncf %3 : vector<4x256xf32> to vector<4x256xbf16>
    %c0_2 = arith.constant 0 : index
    %c0_3 = arith.constant 0 : index
    %5 = vector.load %arg4[%c0_2, %c0_3] : memref<256x128xbf16, #tpu.memory_space<vmem>>, vector<256x128xbf16>
    %cst = arith.constant dense<0.000000e+00> : vector<4x128xf32>
    %6 = tpu.matmul %4, %5, %cst {dimension_numbers = #tpu.dot_dimension_numbers<[1], [0], [0], [1], [0, 0, 1, 1], [], []>} : vector<4x256xbf16>, vector<256x128xbf16>, vector<4x128xf32> -> vector<4x128xf32>
    %c0_4 = arith.constant 0 : index
    %c0_5 = arith.constant 0 : index
    %7 = vector.load %arg5[%c0_4, %c0_5] : memref<1x128xf32, #tpu.memory_space<vmem>>, vector<1x128xf32>
    %8 = vector.broadcast %7 : vector<1x128xf32> to vector<4x128xf32>
    %9 = arith.addf %6, %8 : vector<4x128xf32>
    %cst_6 = arith.constant 0.000000e+00 : f32
    %10 = vector.broadcast %cst_6 : f32 to vector<4x128xf32>
    %11 = arith.maximumf %9, %10 : vector<4x128xf32>
    %12 = arith.truncf %11 : vector<4x128xf32> to vector<4x128xbf16>
    %c0_7 = arith.constant 0 : index
    %c0_8 = arith.constant 0 : index
    %13 = vector.load %arg8[%c0_7, %c0_8] : memref<4x180xf32, #tpu.memory_space<vmem>>, vector<4x180xf32>
    %c0_9 = arith.constant 0 : index
    %c0_10 = arith.constant 0 : index
    %14 = vector.load %arg6[%c0_9, %c0_10] : memref<128x180xbf16, #tpu.memory_space<vmem>>, vector<128x180xbf16>
    %cst_11 = arith.constant dense<0.000000e+00> : vector<4x180xf32>
    %15 = tpu.matmul %12, %14, %cst_11 {dimension_numbers = #tpu.dot_dimension_numbers<[1], [0], [0], [1], [0, 0, 1, 1], [], []>} : vector<4x128xbf16>, vector<128x180xbf16>, vector<4x180xf32> -> vector<4x180xf32>
    %16 = arith.addf %13, %15 : vector<4x180xf32>
    %c0_12 = arith.constant 0 : index
    %c0_13 = arith.constant 0 : index
    %17 = vector.load %arg8[%c0_12, %c0_13] : memref<4x180xf32, #tpu.memory_space<vmem>>, vector<4x180xf32>
    tpu.vector_store %arg8[%c0_12, %c0_13], %16 {strides = array<i32>} : memref<4x180xf32, #tpu.memory_space<vmem>>, vector<4x180xf32>,
    return
  }
  func.func @transform_0(%arg0: i32) -> (i32, i32, i32) {
    %c0_i32 = arith.constant 0 : i32
    %c0_i32_0 = arith.constant 0 : i32
    %c0_i32_1 = arith.constant 0 : i32
    %c0_i32_2 = arith.constant 0 : i32
    return %c0_i32, %c0_i32_0, %c0_i32_1 : i32, i32, i32
  }
  func.func @transform_1(%arg0: i32) -> (i32, i32) {
    %c0_i32 = arith.constant 0 : i32
    %c0_i32_0 = arith.constant 0 : i32
    %c0_i32_1 = arith.constant 0 : i32
    return %c0_i32, %c0_i32_0 : i32, i32
  }
  func.func @transform_2(%arg0: i32) -> (i32, i32) {
    %c0_i32 = arith.constant 0 : i32
    %c0_i32_0 = arith.constant 0 : i32
    %c0_i32_1 = arith.constant 0 : i32
    return %c0_i32, %c0_i32_0 : i32, i32
  }
  func.func @transform_3(%arg0: i32) -> (i32, i32) {
    %c0_i32 = arith.constant 0 : i32
    %c0_i32_0 = arith.constant 0 : i32
    return %c0_i32, %arg0 : i32, i32
  }
  func.func @transform_4(%arg0: i32) -> (i32, i32) {
    %c0_i32 = arith.constant 0 : i32
    %c0_i32_0 = arith.constant 0 : i32
    return %c0_i32, %arg0 : i32, i32
  }
  func.func @transform_5(%arg0: i32) -> (i32, i32) {
    %c0_i32 = arith.constant 0 : i32
    %c0_i32_0 = arith.constant 0 : i32
    return %arg0, %c0_i32 : i32, i32
  }
  func.func @transform_6(%arg0: i32) -> (i32, i32) {
    %c0_i32 = arith.constant 0 : i32
    %c0_i32_0 = arith.constant 0 : i32
    %c0_i32_1 = arith.constant 0 : i32
    return %c0_i32, %c0_i32_0 : i32, i32
  }
  func.func @transform_7(%arg0: i32) -> (i32, i32) {
    %c0_i32 = arith.constant 0 : i32
    %c0_i32_0 = arith.constant 0 : i32
    %c0_i32_1 = arith.constant 0 : i32
    return %c0_i32, %c0_i32_0 : i32, i32
  }
}

</mosaic_0001>

<llo_original>
// kernel: parsing_net_forward.1
$region0: #{parsing_net_forward.1}
  #allocation0 [shape = 'u32[]', space=smem, size = 0x4, offset = 0x4, fixed_abs, tag = 'smem constant byte address 0x4 - core index']
  #allocation1 [shape = 'u32[144,128]{1,0:T(1,128)}', space=vmem, size = 0x12000, scoped, tag = 'internal scratch']
  #allocation2 [shape = 'f32[4,256]{1,0:T(4,128)}', space=vmem, size = 0x1000, scoped, tag = 'scratch operand']
  %s0 = inlined_call_operand.vmem [shape: bf16[4,64,32], index: 0, kind: input, shape index: {}]
  %s1 = inlined_call_operand.vmem [shape: bf16[8,64], index: 1, kind: input, shape index: {}]
  %s2 = inlined_call_operand.vmem [shape: f32[8,1], index: 2, kind: input, shape index: {}]
  %s3 = inlined_call_operand.vmem [shape: bf16[256,256], index: 3, kind: input, shape index: {}]
  %s4 = inlined_call_operand.vmem [shape: f32[1,256], index: 4, kind: input, shape index: {}]
  %s5 = inlined_call_operand.vmem [shape: bf16[256,180], index: 5, kind: input, shape index: {}]
  %s6 = inlined_call_operand.vmem [shape: f32[1,180], index: 6, kind: input, shape index: {}]
  %s7 = inlined_call_operand.vmem [shape: f32[4,180], index: 7, kind: output, shape index: {}]
  %s8 = sld [smem:[#allocation0]]
  $region106: #{parsing_net_forward.1} parent=0
    _
  %s10 = ssub.s32 1, %s8
  %s11 = scalar_select 0, %s10, %s8
  $region1: #{parsing_net_forward.1} parent=0
    #allocation3 [shape = 'u8[131072]{0}', space=vmem, size = 0x20000, scoped, tag = 'input window, operand 3']
    loop: start=0, step=1, limit=4
    $region2: #{parsing_net_forward.1} parent=1 // loop_pre_header
      _
    $region3: #{parsing_net_forward.1} parent=1 // loop_header
      %s13 = sphi 0, %s17
      %p14 = scmp.ge.s32.totalorder %s13, 4
      %s21 = sphi 0, %s21
      %s23 = sphi 0, %s21
      %s24 = sphi 0, %s23
      %s38 = sphi 0, %s24
      %s42 = sphi 0, %s42
      %s44 = sphi 0, %s42
      %s45 = sphi 0, %s44
      %s59 = sphi 0, %s45
      %s63 = sphi 0, %s63
      %s65 = sphi 0, %s63
      %s66 = sphi 0, %s65
      %s80 = sphi 0, %s66
      %s86 = sphi 0, %s88
      %s89 = sphi 0, %s86
      %s90 = sphi 0, %s89
      %s106 = sphi 0, %s90
      %s112 = sphi 0, %s114
      %s115 = sphi 0, %s112
      %s116 = sphi 0, %s115
      %s132 = sphi 0, %s116
      %s138 = sphi 0, %s140
      %s141 = sphi 0, %s138
      %s142 = sphi 0, %s141
      %s158 = sphi 0, %s142
      %s162 = sphi 0, %s162
      %s164 = sphi 0, %s162
      %s165 = sphi 0, %s164
      %s179 = sphi 0, %s165
      %s183 = sphi 0, %s183
      %s185 = sphi 0, %s183
      %s186 = sphi 0, %s185
      %s200 = sphi 0, %s186
    $region4: #{parsing_net_forward.1} parent=1 // loop_header_branch
      %16 = sbr.rel (%p14) target = $region8
    $region5: #{parsing_net_forward.1} parent=1 // loop_body
      %s18 = ssub.s32 %s13, 1
      %s19 = ssub.s32 %s13, 2
      %s20 = sadd.s32 %s13, 1
      %s22 = sadd.s32 %s21, 1
      %p25 = scmp.eq.s32.totalorder %s13, 1
      %p26 = scmp.ne.s32.totalorder %s21, %s23
      %p27 = scmp.eq.s32.totalorder %s13, 0
      %p28 = por %p26, %p27
      %p29 = scmp.ne.s32.totalorder %s21, %s23
      %p30 = scmp.eq.s32.totalorder %s18, 1
      %p31 = por %p29, %p30
      %p32 = scmp.ne.s32.totalorder %s23, %s24
      %p33 = scmp.eq.s32.totalorder %s18, 0
      %p34 = por %p32, %p33
      %p35 = scmp.ne.s32.totalorder %s23, %s24
      %p36 = scmp.eq.s32.totalorder %s19, 1
      %p37 = por %p35, %p36
      %p39 = scmp.ne.s32.totalorder %s24, %s38
      %p40 = scmp.eq.s32.totalorder %s19, 0
      %p41 = por %p39, %p40
      %s43 = sadd.s32 %s42, 1
      %p46 = scmp.eq.s32.totalorder %s13, 1
      %p47 = scmp.ne.s32.totalorder %s42, %s44
      %p48 = scmp.eq.s32.totalorder %s13, 0
      %p49 = por %p47, %p48
      %p50 = scmp.ne.s32.totalorder %s42, %s44
      %p51 = scmp.eq.s32.totalorder %s18, 1
      %p52 = por %p50, %p51
      %p53 = scmp.ne.s32.totalorder %s44, %s45
      %p54 = scmp.eq.s32.totalorder %s18, 0
      %p55 = por %p53, %p54
      %p56 = scmp.ne.s32.totalorder %s44, %s45
      %p57 = scmp.eq.s32.totalorder %s19, 1
      %p58 = por %p56, %p57
      %p60 = scmp.ne.s32.totalorder %s45, %s59
      %p61 = scmp.eq.s32.totalorder %s19, 0
      %p62 = por %p60, %p61
      %s64 = sadd.s32 %s63, 1
      %p67 = scmp.eq.s32.totalorder %s13, 1
      %p68 = scmp.ne.s32.totalorder %s63, %s65
      %p69 = scmp.eq.s32.totalorder %s13, 0
      %p70 = por %p68, %p69
      %p71 = scmp.ne.s32.totalorder %s63, %s65
      %p72 = scmp.eq.s32.totalorder %s18, 1
      %p73 = por %p71, %p72
      %p74 = scmp.ne.s32.totalorder %s65, %s66
      %p75 = scmp.eq.s32.totalorder %s18, 0
      %p76 = por %p74, %p75
      %p77 = scmp.ne.s32.totalorder %s65, %s66
      %p78 = scmp.eq.s32.totalorder %s19, 1
      %p79 = por %p77, %p78
      %p81 = scmp.ne.s32.totalorder %s66, %s80
      %p82 = scmp.eq.s32.totalorder %s19, 0
      %p83 = por %p81, %p82
      %s84 = ssub.s32 %s13, %s20
      %p85 = scmp.eq.s32.totalorder %s84, 0
      %s87 = sadd.s32 %s86, 1
      %s88 = scalar_select %p85, %s86, %s87
      %p91 = pneg %p85
      %p92 = scmp.eq.s32.totalorder %s13, 1
      %p93 = por %p91, %p92
      %p94 = scmp.ne.s32.totalorder %s86, %s89
      %p95 = scmp.eq.s32.totalorder %s13, 0
      %p96 = por %p94, %p95
      %p97 = scmp.ne.s32.totalorder %s86, %s89
      %p98 = scmp.eq.s32.totalorder %s18, 1
      %p99 = por %p97, %p98
      %p100 = scmp.ne.s32.totalorder %s89, %s90
      %p101 = scmp.eq.s32.totalorder %s18, 0
      %p102 = por %p100, %p101
      %p103 = scmp.ne.s32.totalorder %s89, %s90
      %p104 = scmp.eq.s32.totalorder %s19, 1
      %p105 = por %p103, %p104
      %p107 = scmp.ne.s32.totalorder %s90, %s106
      %p108 = scmp.eq.s32.totalorder %s19, 0
      %p109 = por %p107, %p108
      %s110 = ssub.s32 %s13, %s20
      %p111 = scmp.eq.s32.totalorder %s110, 0
      %s113 = sadd.s32 %s112, 1
      %s114 = scalar_select %p111, %s112, %s113
      %p117 = pneg %p111
      %p118 = scmp.eq.s32.totalorder %s13, 1
      %p119 = por %p117, %p118
      %p120 = scmp.ne.s32.totalorder %s112, %s115
      %p121 = scmp.eq.s32.totalorder %s13, 0
      %p122 = por %p120, %p121
      %p123 = scmp.ne.s32.totalorder %s112, %s115
      %p124 = scmp.eq.s32.totalorder %s18, 1
      %p125 = por %p123, %p124
      %p126 = scmp.ne.s32.totalorder %s115, %s116
      %p127 = scmp.eq.s32.totalorder %s18, 0
      %p128 = por %p126, %p127
      %p129 = scmp.ne.s32.totalorder %s115, %s116
      %p130 = scmp.eq.s32.totalorder %s19, 1
      %p131 = por %p129, %p130
      %p133 = scmp.ne.s32.totalorder %s116, %s132
      %p134 = scmp.eq.s32.totalorder %s19, 0
      %p135 = por %p133, %p134
      %s136 = ssub.s32 %s13, %s20
      %p137 = scmp.eq.s32.totalorder %s136, 0
      %s139 = sadd.s32 %s138, 1
      %s140 = scalar_select %p137, %s138, %s139
      %p143 = pneg %p137
      %p144 = scmp.eq.s32.totalorder %s13, 1
      %p145 = por %p143, %p144
      %p146 = scmp.ne.s32.totalorder %s138, %s141
      %p147 = scmp.eq.s32.totalorder %s13, 0
      %p148 = por %p146, %p147
      %p149 = scmp.ne.s32.totalorder %s138, %s141
      %p150 = scmp.eq.s32.totalorder %s18, 1
      %p151 = por %p149, %p150
      %p152 = scmp.ne.s32.totalorder %s141, %s142
      %p153 = scmp.eq.s32.totalorder %s18, 0
      %p154 = por %p152, %p153
      %p155 = scmp.ne.s32.totalorder %s141, %s142
      %p156 = scmp.eq.s32.totalorder %s19, 1
      %p157 = por %p155, %p156
      %p159 = scmp.ne.s32.totalorder %s142, %s158
      %p160 = scmp.eq.s32.totalorder %s19, 0
      %p161 = por %p159, %p160
      %s163 = sadd.s32 %s162, 1
      %p166 = scmp.eq.s32.totalorder %s13, 1
      %p167 = scmp.ne.s32.totalorder %s162, %s164
      %p168 = scmp.eq.s32.totalorder %s13, 0
      %p169 = por %p167, %p168
      %p170 = scmp.ne.s32.totalorder %s162, %s164
      %p171 = scmp.eq.s32.totalorder %s18, 1
      %p172 = por %p170, %p171
      %p173 = scmp.ne.s32.totalorder %s164, %s165
      %p174 = scmp.eq.s32.totalorder %s18, 0
      %p175 = por %p173, %p174
      %p176 = scmp.ne.s32.totalorder %s164, %s165
      %p177 = scmp.eq.s32.totalorder %s19, 1
      %p178 = por %p176, %p177
      %p180 = scmp.ne.s32.totalorder %s165, %s179
      %p181 = scmp.eq.s32.totalorder %s19, 0
      %p182 = por %p180, %p181
      %s184 = sadd.s32 %s183, 1
      %p187 = scmp.eq.s32.totalorder %s13, 1
      %p188 = scmp.ne.s32.totalorder %s183, %s185
      %p189 = scmp.eq.s32.totalorder %s13, 0
      %p190 = por %p188, %p189
      %p191 = scmp.ne.s32.totalorder %s183, %s185
      %p192 = scmp.eq.s32.totalorder %s18, 1
      %p193 = por %p191, %p192
      %p194 = scmp.ne.s32.totalorder %s185, %s186
      %p195 = scmp.eq.s32.totalorder %s18, 0
      %p196 = por %p194, %p195
      %p197 = scmp.ne.s32.totalorder %s185, %s186
      %p198 = scmp.eq.s32.totalorder %s19, 1
      %p199 = por %p197, %p198
      %p201 = scmp.ne.s32.totalorder %s186, %s200
      %p202 = scmp.eq.s32.totalorder %s19, 0
      %p203 = por %p201, %p202
      %p204 = scmp.le.s32.totalorder 1, %s13
      %p205 = scmp.lt.s32.totalorder %s13, 3
      %p206 = pnand %p204, %p205
      %p207 = pneg %p206
      // Predicated region
      $region9: #{parsing_net_forward.1} parent=5 // pred_check
        _
      $region10: #{parsing_net_forward.1} parent=5 // pred_check_branch
        %209 = sbr.rel (%p206) target = $region12
      $region11: #{parsing_net_forward.1} parent=5 // pred_region
        %s210 = ssub.s32 %s13, 1
        // Predicated region
        $region13: #{parsing_net_forward.1} parent=11 // pred_check
          %p211 = pneg %p34
        $region14: #{parsing_net_forward.1} parent=11 // pred_check_branch
          %213 = sbr.rel (%p211) target = $region16
        $region15: #{parsing_net_forward.1} parent=11 // pred_region
          _
        $region16: #{parsing_net_forward.1} parent=11 // pred_fallthru
          _
        // Predicated region
        $region17: #{parsing_net_forward.1} parent=11 // pred_check
          %p214 = pneg %p55
        $region18: #{parsing_net_forward.1} parent=11 // pred_check_branch
          %216 = sbr.rel (%p214) target = $region20
        $region19: #{parsing_net_forward.1} parent=11 // pred_region
          _
        $region20: #{parsing_net_forward.1} parent=11 // pred_fallthru
          _
        // Predicated region
        $region21: #{parsing_net_forward.1} parent=11 // pred_check
          %p217 = pneg %p76
        $region22: #{parsing_net_forward.1} parent=11 // pred_check_branch
          %219 = sbr.rel (%p217) target = $region24
        $region23: #{parsing_net_forward.1} parent=11 // pred_region
          _
        $region24: #{parsing_net_forward.1} parent=11 // pred_fallthru
          _
        // Predicated region
        $region25: #{parsing_net_forward.1} parent=11 // pred_check
          %p220 = pneg %p175
        $region26: #{parsing_net_forward.1} parent=11 // pred_check_branch
          %222 = sbr.rel (%p220) target = $region28
        $region27: #{parsing_net_forward.1} parent=11 // pred_region
          _
        $region28: #{parsing_net_forward.1} parent=11 // pred_fallthru
          _
      $region12: #{parsing_net_forward.1} parent=5 // pred_fallthru
        _
      %p223 = scmp.lt.s32.totalorder %s13, 2
      // Predicated region
      $region29: #{parsing_net_forward.1} parent=5 // pred_check
        %p224 = pneg %p223
      $region30: #{parsing_net_forward.1} parent=5 // pred_check_branch
        %226 = sbr.rel (%p224) target = $region32
      $region31: #{parsing_net_forward.1} parent=5 // pred_region
        // Predicated region
        $region33: #{parsing_net_forward.1} parent=31 // pred_check
          %p227 = pneg %p96
        $region34: #{parsing_net_forward.1} parent=31 // pred_check_branch
          %229 = sbr.rel (%p227) target = $region36
        $region35: #{parsing_net_forward.1} parent=31 // pred_region
          %s230 = sand.u32 %s86, 1
          %s231 = sand.u32 %s86, 1
          %s232 = smul.addr %s231, 128
          %s233 = scalar_lea.vmem [#allocation3], %s232
          %s234 = smul.addr %s13, 4
          %s235 = scalar_lea.vmem %s3, %s234
          // Predicated region
          $region37: #{parsing_net_forward.1} parent=35 // pred_check
            _
          $region38: #{parsing_net_forward.1} parent=35 // pred_check_branch
            %237 = sbr.rel (0) target = $region40
          $region39: #{parsing_net_forward.1} parent=35 // pred_region
            // Predicated region
            $region41: #{parsing_net_forward.1} parent=39 // pred_check
              _
            $region42: #{parsing_net_forward.1} parent=39 // pred_check_branch
              %239 = sbr.rel target = $region44
            $region43: #{parsing_net_forward.1} parent=39 // pred_region
              // Predicated region
              $region56: #{parsing_net_forward.1} parent=43 // pred_check
                _
              $region57: #{parsing_net_forward.1} parent=43 // pred_check_branch
                %316 = sbr.rel (0) target = $region59
              $region58: #{parsing_net_forward.1} parent=43 // pred_region
                loop: start=0, step=1, limit=1
                $region60: #{parsing_net_forward.1} parent=58 // loop_pre_header
                  _
                $region61: #{parsing_net_forward.1} parent=58 // loop_header
                  %s318 = sphi 0, %s322
                  %p319 = scmp.ge.s32.totalorder %s318, 1
                  %s323 = sphi %s235, %s235
                  %s324 = sphi %s233, %s233
                $region62: #{parsing_net_forward.1} parent=58 // loop_header_branch
                  %321 = sbr.rel (%p319) target = $region66
                $region63: #{parsing_net_forward.1} parent=58 // loop_body
                  _
                $region64: #{parsing_net_forward.1} parent=58 // loop_footer
                  %s322 = sadd.s32 1, %s318
                $region65: #{parsing_net_forward.1} parent=58 // loop_footer_branch
                  %317 = sbr.rel target = $region61
                $region66: #{parsing_net_forward.1} parent=58 // loop_exit
                  _
                loop: start=0, step=1, limit=1
                $region67: #{parsing_net_forward.1} parent=58 // loop_pre_header
                  _
                $region68: #{parsing_net_forward.1} parent=58 // loop_header
                  %s327 = sphi 0, %s331
                  %p328 = scmp.ge.s32.totalorder %s327, 1
                  %s332 = sphi %s235, %s235
                  %s333 = sphi %s233, %s233
                $region69: #{parsing_net_forward.1} parent=58 // loop_header_branch
                  %330 = sbr.rel (%p328) target = $region73
                $region70: #{parsing_net_forward.1} parent=58 // loop_body
                  %v334 = vld [vmem:[%s332] sm:$0xf]
                  %335 = vst [vmem:[%s333] sm:$0xf] %v334
                  %v336 = vld [vmem:[%s332 + $0x8] sm:$0xf]
                  %337 = vst [vmem:[%s333 + $0x4] sm:$0xf] %v336
                  %v338 = vld [vmem:[%s332 + $0x10] sm:$0xf]
                  %339 = vst [vmem:[%s333 + $0x8] sm:$0xf] %v338
                  %v340 = vld [vmem:[%s332 + $0x18] sm:$0xf]
                  %341 = vst [vmem:[%s333 + $0xc] sm:$0xf] %v340
                  %v342 = vld [vmem:[%s332 + $0x20] sm:$0xf]
                  %343 = vst [vmem:[%s333 + $0x10] sm:$0xf] %v342
                  %v344 = vld [vmem:[%s332 + $0x28] sm:$0xf]
                  %345 = vst [vmem:[%s333 + $0x14] sm:$0xf] %v344
                  %v346 = vld [vmem:[%s332 + $0x30] sm:$0xf]
                  %347 = vst [vmem:[%s333 + $0x18] sm:$0xf] %v346
                  %v348 = vld [vmem:[%s332 + $0x38] sm:$0xf]
                  %349 = vst [vmem:[%s333 + $0x1c] sm:$0xf] %v348
                  %v350 = vld [vmem:[%s332 + $0x40] sm:$0xf]
                  %351 = vst [vmem:[%s333 + $0x20] sm:$0xf] %v350
                  %v352 = vld [vmem:[%s332 + $0x48] sm:$0xf]
                  %353 = vst [vmem:[%s333 + $0x24] sm:$0xf] %v352
                  %v354 = vld [vmem:[%s332 + $0x50] sm:$0xf]
                  %355 = vst [vmem:[%s333 + $0x28] sm:$0xf] %v354
                  %v356 = vld [vmem:[%s332 + $0x58] sm:$0xf]
                  %357 = vst [vmem:[%s333 + $0x2c] sm:$0xf] %v356
                  %v358 = vld [vmem:[%s332 + $0x60] sm:$0xf]
                  %359 = vst [vmem:[%s333 + $0x30] sm:$0xf] %v358
                  %v360 = vld [vmem:[%s332 + $0x68] sm:$0xf]
                  %361 = vst [vmem:[%s333 + $0x34] sm:$0xf] %v360
                  %v362 = vld [vmem:[%s332 + $0x70] sm:$0xf]
                  %363 = vst [vmem:[%s333 + $0x38] sm:$0xf] %v362
                  %v364 = vld [vmem:[%s332 + $0x78] sm:$0xf]
                  %365 = vst [vmem:[%s333 + $0x3c] sm:$0xf] %v364
                  %v366 = vld [vmem:[%s332 + $0x80] sm:$0xf]
                  %367 = vst [vmem:[%s333 + $0x40] sm:$0xf] %v366
                  %v368 = vld [vmem:[%s332 + $0x88] sm:$0xf]
                  %369 = vst [vmem:[%s333 + $0x44] sm:$0xf] %v368
                  %v370 = vld [vmem:[%s332 + $0x90] sm:$0xf]
                  %371 = vst [vmem:[%s333 + $0x48] sm:$0xf] %v370
                  %v372 = vld [vmem:[%s332 + $0x98] sm:$0xf]
                  %373 = vst [vmem:[%s333 + $0x4c] sm:$0xf] %v372
                  %v374 = vld [vmem:[%s332 + $0xa0] sm:$0xf]
                  %375 = vst [vmem:[%s333 + $0x50] sm:$0xf] %v374
                  %v376 = vld [vmem:[%s332 + $0xa8] sm:$0xf]
                  %377 = vst [vmem:[%s333 + $0x54] sm:$0xf] %v376
                  %v378 = vld [vmem:[%s332 + $0xb0] sm:$0xf]
                  %379 = vst [vmem:[%s333 + $0x58] sm:$0xf] %v378
                  %v380 = vld [vmem:[%s332 + $0xb8] sm:$0xf]
                  %381 = vst [vmem:[%s333 + $0x5c] sm:$0xf] %v380
                  %v382 = vld [vmem:[%s332 + $0xc0] sm:$0xf]
                  %383 = vst [vmem:[%s333 + $0x60] sm:$0xf] %v382
                  %v384 = vld [vmem:[%s332 + $0xc8] sm:$0xf]
                  %385 = vst [vmem:[%s333 + $0x64] sm:$0xf] %v384
                  %v386 = vld [vmem:[%s332 + $0xd0] sm:$0xf]
                  %387 = vst [vmem:[%s333 + $0x68] sm:$0xf] %v386
                  %v388 = vld [vmem:[%s332 + $0xd8] sm:$0xf]
                  %389 = vst [vmem:[%s333 + $0x6c] sm:$0xf] %v388
                  %v390 = vld [vmem:[%s332 + $0xe0] sm:$0xf]
                  %391 = vst [vmem:[%s333 + $0x70] sm:$0xf] %v390
                  %v392 = vld [vmem:[%s332 + $0xe8] sm:$0xf]
                  %393 = vst [vmem:[%s333 + $0x74] sm:$0xf] %v392
                  %v394 = vld [vmem:[%s332 + $0xf0] sm:$0xf]
                  %395 = vst [vmem:[%s333 + $0x78] sm:$0xf] %v394
                  %v396 = vld [vmem:[%s332 + $0xf8] sm:$0xf]
                  %397 = vst [vmem:[%s333 + $0x7c] sm:$0xf] %v396
                $region71: #{parsing_net_forward.1} parent=58 // loop_footer
                  %s331 = sadd.s32 1, %s327
                $region72: #{parsing_net_forward.1} parent=58 // loop_footer_branch
                  %326 = sbr.rel target = $region68
                $region73: #{parsing_net_forward.1} parent=58 // loop_exit
                  _
              $region59: #{parsing_net_forward.1} parent=43 // pred_fallthru
                _
            $region44: #{parsing_net_forward.1} parent=39 // pred_fallthru
              _
            // Predicated region
            $region45: #{parsing_net_forward.1} parent=39 // pred_check
              _
            $region46: #{parsing_net_forward.1} parent=39 // pred_check_branch
              %241 = sbr.rel (0) target = $region48
            $region47: #{parsing_net_forward.1} parent=39 // pred_region
              loop: start=0, step=1, limit=1
              $region49: #{parsing_net_forward.1} parent=47 // loop_pre_header
                _
              $region50: #{parsing_net_forward.1} parent=47 // loop_header
                %s244 = sphi 0, %s248
                %p245 = scmp.ge.s32.totalorder %s244, 1
                %s249 = sphi %s235, %s235
                %s250 = sphi %s233, %s233
              $region51: #{parsing_net_forward.1} parent=47 // loop_header_branch
                %247 = sbr.rel (%p245) target = $region55
              $region52: #{parsing_net_forward.1} parent=47 // loop_body
                %v251 = vld [vmem:[%s249] sm:$0xf]
                %252 = vst [vmem:[%s250] sm:$0xf] %v251
                %v253 = vld [vmem:[%s249 + $0x8] sm:$0xf]
                %254 = vst [vmem:[%s250 + $0x4] sm:$0xf] %v253
                %v255 = vld [vmem:[%s249 + $0x10] sm:$0xf]
                %256 = vst [vmem:[%s250 + $0x8] sm:$0xf] %v255
                %v257 = vld [vmem:[%s249 + $0x18] sm:$0xf]
                %258 = vst [vmem:[%s250 + $0xc] sm:$0xf] %v257
                %v259 = vld [vmem:[%s249 + $0x20] sm:$0xf]
                %260 = vst [vmem:[%s250 + $0x10] sm:$0xf] %v259
                %v261 = vld [vmem:[%s249 + $0x28] sm:$0xf]
                %262 = vst [vmem:[%s250 + $0x14] sm:$0xf] %v261
                %v263 = vld [vmem:[%s249 + $0x30] sm:$0xf]
                %264 = vst [vmem:[%s250 + $0x18] sm:$0xf] %v263
                %v265 = vld [vmem:[%s249 + $0x38] sm:$0xf]
                %266 = vst [vmem:[%s250 + $0x1c] sm:$0xf] %v265
                %v267 = vld [vmem:[%s249 + $0x40] sm:$0xf]
                %268 = vst [vmem:[%s250 + $0x20] sm:$0xf] %v267
                %v269 = vld [vmem:[%s249 + $0x48] sm:$0xf]
                %270 = vst [vmem:[%s250 + $0x24] sm:$0xf] %v269
                %v271 = vld [vmem:[%s249 + $0x50] sm:$0xf]
                %272 = vst [vmem:[%s250 + $0x28] sm:$0xf] %v271
                %v273 = vld [vmem:[%s249 + $0x58] sm:$0xf]
                %274 = vst [vmem:[%s250 + $0x2c] sm:$0xf] %v273
                %v275 = vld [vmem:[%s249 + $0x60] sm:$0xf]
                %276 = vst [vmem:[%s250 + $0x30] sm:$0xf] %v275
                %v277 = vld [vmem:[%s249 + $0x68] sm:$0xf]
                %278 = vst [vmem:[%s250 + $0x34] sm:$0xf] %v277
                %v279 = vld [vmem:[%s249 + $0x70] sm:$0xf]
                %280 = vst [vmem:[%s250 + $0x38] sm:$0xf] %v279
                %v281 = vld [vmem:[%s249 + $0x78] sm:$0xf]
                %282 = vst [vmem:[%s250 + $0x3c] sm:$0xf] %v281
                %v283 = vld [vmem:[%s249 + $0x80] sm:$0xf]
                %284 = vst [vmem:[%s250 + $0x40] sm:$0xf] %v283
                %v285 = vld [vmem:[%s249 + $0x88] sm:$0xf]
                %286 = vst [vmem:[%s250 + $0x44] sm:$0xf] %v285
                %v287 = vld [vmem:[%s249 + $0x90] sm:$0xf]
                %288 = vst [vmem:[%s250 + $0x48] sm:$0xf] %v287
                %v289 = vld [vmem:[%s249 + $0x98] sm:$0xf]
                %290 = vst [vmem:[%s250 + $0x4c] sm:$0xf] %v289
                %v291 = vld [vmem:[%s249 + $0xa0] sm:$0xf]
                %292 = vst [vmem:[%s250 + $0x50] sm:$0xf] %v291
                %v293 = vld [vmem:[%s249 + $0xa8] sm:$0xf]
                %294 = vst [vmem:[%s250 + $0x54] sm:$0xf] %v293
                %v295 = vld [vmem:[%s249 + $0xb0] sm:$0xf]
                %296 = vst [vmem:[%s250 + $0x58] sm:$0xf] %v295
                %v297 = vld [vmem:[%s249 + $0xb8] sm:$0xf]
                %298 = vst [vmem:[%s250 + $0x5c] sm:$0xf] %v297
                %v299 = vld [vmem:[%s249 + $0xc0] sm:$0xf]
                %300 = vst [vmem:[%s250 + $0x60] sm:$0xf] %v299
                %v301 = vld [vmem:[%s249 + $0xc8] sm:$0xf]
                %302 = vst [vmem:[%s250 + $0x64] sm:$0xf] %v301
                %v303 = vld [vmem:[%s249 + $0xd0] sm:$0xf]
                %304 = vst [vmem:[%s250 + $0x68] sm:$0xf] %v303
                %v305 = vld [vmem:[%s249 + $0xd8] sm:$0xf]
                %306 = vst [vmem:[%s250 + $0x6c] sm:$0xf] %v305
                %v307 = vld [vmem:[%s249 + $0xe0] sm:$0xf]
                %308 = vst [vmem:[%s250 + $0x70] sm:$0xf] %v307
                %v309 = vld [vmem:[%s249 + $0xe8] sm:$0xf]
                %310 = vst [vmem:[%s250 + $0x74] sm:$0xf] %v309
                %v311 = vld [vmem:[%s249 + $0xf0] sm:$0xf]
                %312 = vst [vmem:[%s250 + $0x78] sm:$0xf] %v311
                %v313 = vld [vmem:[%s249 + $0xf8] sm:$0xf]
                %314 = vst [vmem:[%s250 + $0x7c] sm:$0xf] %v313
              $region53: #{parsing_net_forward.1} parent=47 // loop_footer
                %s248 = sadd.s32 1, %s244
              $region54: #{parsing_net_forward.1} parent=47 // loop_footer_branch
                %243 = sbr.rel target = $region50
              $region55: #{parsing_net_forward.1} parent=47 // loop_exit
                _
            $region48: #{parsing_net_forward.1} parent=39 // pred_fallthru
              _
          $region40: #{parsing_net_forward.1} parent=35 // pred_fallthru
            _
          %398 = vnop
        $region36: #{parsing_net_forward.1} parent=31 // pred_fallthru
          _
        // Predicated region
        $region74: #{parsing_net_forward.1} parent=31 // pred_check
          %p399 = pneg %p122
        $region75: #{parsing_net_forward.1} parent=31 // pred_check_branch
          %401 = sbr.rel (%p399) target = $region77
        $region76: #{parsing_net_forward.1} parent=31 // pred_region
          %p402 = scmp.lt.s32.totalorder %s13, 1
          %s403 = scalar_select %p402, %s13, 1
          %s404 = scalar_lea.vmem %s4, %s403
        $region77: #{parsing_net_forward.1} parent=31 // pred_fallthru
          _
        // Predicated region
        $region78: #{parsing_net_forward.1} parent=31 // pred_check
          %p405 = pneg %p148
        $region79: #{parsing_net_forward.1} parent=31 // pred_check_branch
          %407 = sbr.rel (%p405) target = $region81
        $region80: #{parsing_net_forward.1} parent=31 // pred_region
          %s408 = smul.u32 16, %s13
          %p409 = scmp.lt.s32.totalorder %s408, 31
          %s410 = scalar_select %p409, %s408, 31
          %s411 = smul.addr %s410, 2
          %s412 = smul.addr %s411, 4
          %s413 = scalar_lea.vmem %s5, %s412
          %s414 = smul.u32 16, %s13
        $region81: #{parsing_net_forward.1} parent=31 // pred_fallthru
          _
      $region32: #{parsing_net_forward.1} parent=5 // pred_fallthru
        _
      %p415 = scmp.le.s32.totalorder 1, %s13
      %p416 = scmp.lt.s32.totalorder %s13, 3
      %p417 = pnand %p415, %p416
      %p418 = pneg %p417
      // Predicated region
      $region82: #{parsing_net_forward.1} parent=5 // pred_check
        _
      $region83: #{parsing_net_forward.1} parent=5 // pred_check_branch
        %420 = sbr.rel (%p417) target = $region85
      $region84: #{parsing_net_forward.1} parent=5 // pred_region
        %s421 = ssub.s32 %s13, 1
        %s422 = sand.u32 %s89, 1
        %s423 = sand.u32 %s89, 1
        %s424 = smul.addr %s423, 128
        %s425 = scalar_lea.vmem [#allocation3], %s424
        // Predicated region
        $region86: #{parsing_net_forward.1} parent=84 // pred_check
          %p426 = pneg %p102
        $region87: #{parsing_net_forward.1} parent=84 // pred_check_branch
          %428 = sbr.rel (%p426) target = $region89
        $region88: #{parsing_net_forward.1} parent=84 // pred_region
          _
        $region89: #{parsing_net_forward.1} parent=84 // pred_fallthru
          _
        %p429 = pneg %p34
        %p430 = pneg %p31
        %p431 = pneg %p55
        %p432 = pneg %p52
        %p433 = pneg %p76
        %p434 = pneg %p73
        %s435 = sand.u32 %s89, 1
        %s436 = sand.u32 %s89, 1
        %s437 = smul.addr %s436, 128
        %s438 = scalar_lea.vmem [#allocation3], %s437
        %p439 = pneg %p102
        %p440 = pneg %p99
        %p441 = scmp.lt.s32.totalorder %s18, 1
        %s442 = scalar_select %p441, %s18, 1
        %s443 = scalar_lea.vmem %s4, %s442
        %p444 = pneg %p128
        %p445 = pneg %p125
        %s446 = smul.u32 16, %s18
        %p447 = scmp.lt.s32.totalorder %s446, 31
        %s448 = scalar_select %p447, %s446, 31
        %s449 = smul.addr %s448, 2
        %s450 = smul.addr %s449, 4
        %s451 = scalar_lea.vmem %s5, %s450
        %p452 = pneg %p154
        %p453 = pneg %p151
        %p454 = pneg %p175
        %p455 = pneg %p172
        %p456 = pneg %p196
        %p457 = pneg %p193
        %p458 = scmp.lt.s32.totalorder %s18, 1
        %s459 = scalar_select %p458, %s18, 1
        %s460 = scalar_lea.vmem %s4, %s459
        %s461 = smul.u32 16, %s18
        %p462 = scmp.lt.s32.totalorder %s461, 31
        %s463 = scalar_select %p462, %s461, 31
        %s464 = smul.addr %s463, 2
        %s465 = smul.addr %s464, 4
        %s466 = scalar_lea.vmem %s5, %s465
        %s467 = smul.u32 16, %s18
        %p469 = scmp.eq.s32.totalorder %s18, 0
        // Predicated region
        $region90: #{parsing_net_forward.1} parent=84 // pred_check
          %p470 = pneg %p469
        $region91: #{parsing_net_forward.1} parent=84 // pred_check_branch
          %472 = sbr.rel (%p470) target = $region93
        $region92: #{parsing_net_forward.1} parent=84 // pred_region
          %v473 = vld [vmem:[%s1] sm:$0xf]
          %v474 = vld [vmem:[%s0] sm:$0xf]
          %v475 = vld [vmem:[%s0 + $0x4] sm:$0xf]
          %v476 = vld [vmem:[%s0 + $0x8] sm:$0xf]
          %v477 = vld [vmem:[%s0 + $0xc] sm:$0xf]
          %v478 = vld [vmem:[%s0 + $0x10] sm:$0xf]
          %v479 = vld [vmem:[%s0 + $0x14] sm:$0xf]
          %v480 = vld [vmem:[%s0 + $0x18] sm:$0xf]
          %v481 = vld [vmem:[%s0 + $0x1c] sm:$0xf]
          %v482 = vld [vmem:[%s2] sm:$0xff]
          %484 = vset.pattern.permute.xlu0 0
          %485 = vperm.xlu0 %484, %v482
          %v486 = vpop.permute.xlu0 %485
          %v496 = vunpack.c.l.b16 %v474
          %v497 = vunpack.c.l.b16 %v475
          %v498 = vunpack.c.l.b16 %v476
          %v499 = vunpack.c.l.b16 %v477
          %v500 = vunpack.c.l.b16 %v478
          %v501 = vunpack.c.l.b16 %v479
          %v502 = vunpack.c.l.b16 %v480
          %v503 = vunpack.c.l.b16 %v481
          %v504 = vpack.c.b16 %v497, %v496
          %v505 = vpack.c.b16 %v499, %v498
          %v506 = vpack.c.b16 %v501, %v500
          %v507 = vpack.c.b16 %v503, %v502
          %vm512 = vcmask 523264
          %v514 = vsel %vm512, %v473, 0
          %516 = vmatprep.subr.bf16.mxu0 0
          %517 = vmatpush1.bf16.msra.mxu0 %v504
          %518 = vmatprep.subr.bf16.mxu0 0
          %519 = vmatpush1.bf16.msra.mxu0 %v505
          %520 = vmatprep.subr.bf16.mxu0 0
          %521 = vmatpush1.bf16.msra.mxu0 %v506
          %522 = vmatprep.subr.bf16.mxu0 0
          %523 = vmatpush1.bf16.msra.mxu0 %v507
          %524 = vmatprep.subr.bf16.mxu0 0
          %525 = vmatpush1.bf16.msra.mxu0 0
          %526 = vmatprep.subr.bf16.mxu0 0
          %527 = vmatpush1.bf16.msra.mxu0 0
          %528 = vmatprep.subr.bf16.mxu0 0
          %529 = vmatpush1.bf16.msra.mxu0 0
          %530 = vmatprep.subr.bf16.mxu0 0
          %531 = vmatpush1.bf16.msra.mxu0 0
          %532 = vmatprep.subr.bf16.mxu0 0
          %533 = vmatpush1.bf16.msra.mxu0 0
          %534 = vmatprep.subr.bf16.mxu0 0
          %535 = vmatpush1.bf16.msra.mxu0 0
          %536 = vmatprep.subr.bf16.mxu0 0
          %537 = vmatpush1.bf16.msra.mxu0 0
          %538 = vmatprep.subr.bf16.mxu0 0
          %539 = vmatpush1.bf16.msra.mxu0 0
          %540 = vmatprep.subr.bf16.mxu0 0
          %541 = vmatpush1.bf16.msra.mxu0 0
          %542 = vmatprep.subr.bf16.mxu0 0
          %543 = vmatpush1.bf16.msra.mxu0 0
          %544 = vmatprep.subr.bf16.mxu0 0
          %545 = vmatpush1.bf16.msra.mxu0 0
          %546 = vmatprep.subr.bf16.mxu0 0
          %547 = vmatpush1.bf16.msra.mxu0 0
          %548 = vmatprep.mubr.bf16.mxu0 0
          %549 = vmatmul.mubr.bf16.gmra.mrb[0].mxu0 %v514
          %v550 = vpop.f32.mrb[0].mxu0
          %v551 = vadd.f32 %v486, %v550
          %v552 = vpop.f32.mrb[0].mxu0
          %v553 = vpop.f32.mrb[0].mxu0
          %v554 = vpop.f32.mrb[0].mxu0
          %555 = vdwg.mxu0
          %vm556 = vcmask 253952
          %557 = vst.msk [vmem:[#allocation2] sm:$0x1] %vm556, %v551
          %v559 = vrot.slane %v551, 5
          %v560 = vrot.slane %v559, 4
          %561 = vrot.lane.b32.xlu0 %v560, 32
          %v562 = vpop.permute.xlu0 %561
          %vm564 = vcmask 516352
          %565 = vst.msk [vmem:[#allocation2] sm:$0x1] %vm564, %v562
          %v566 = vrot.slane %v551, 6
          %v567 = vrot.slane %v566, 4
          %568 = vrot.lane.b32.xlu0 %v567, 64
          %v569 = vpop.permute.xlu0 %568
          %vm571 = vcmask 778752
          %572 = vst.msk [vmem:[#allocation2] sm:$0x1] %vm571, %v569
          %v573 = vrot.slane %v551, 7
          %v574 = vrot.slane %v573, 4
          %575 = vrot.lane.b32.xlu0 %v574, 96
          %v576 = vpop.permute.xlu0 %575
          %vm578 = vcmask 1041152
          %579 = vst.msk [vmem:[#allocation2] sm:$0x1] %vm578, %v576
          %v580 = vcombine.high %v551, %v551
          %582 = vst.msk [vmem:[#allocation2 + $0x4] sm:$0x1] %vm556, %v580
          %v583 = vrot.slane %v580, 5
          %v584 = vrot.slane %v583, 4
          %585 = vrot.lane.b32.xlu0 %v584, 32
          %v586 = vpop.permute.xlu0 %585
          %588 = vst.msk [vmem:[#allocation2 + $0x4] sm:$0x1] %vm564, %v586
          %v589 = vrot.slane %v580, 6
          %v590 = vrot.slane %v589, 4
          %591 = vrot.lane.b32.xlu0 %v590, 64
          %v592 = vpop.permute.xlu0 %591
          %594 = vst.msk [vmem:[#allocation2 + $0x4] sm:$0x1] %vm571, %v592
          %v595 = vrot.slane %v580, 7
          %v596 = vrot.slane %v595, 4
          %597 = vrot.lane.b32.xlu0 %v596, 96
          %v598 = vpop.permute.xlu0 %597
          %600 = vst.msk [vmem:[#allocation2 + $0x4] sm:$0x1] %vm578, %v598
          %v601 = vld [vmem:[%s1] sm:$0xf]
          %s602 = scalar_lea.vmem %s0, 32
          %v603 = vld [vmem:[%s602] sm:$0xf]
          %v604 = vld [vmem:[%s602 + $0x4] sm:$0xf]
          %v605 = vld [vmem:[%s602 + $0x8] sm:$0xf]
          %v606 = vld [vmem:[%s602 + $0xc] sm:$0xf]
          %v607 = vld [vmem:[%s602 + $0x10] sm:$0xf]
          %v608 = vld [vmem:[%s602 + $0x14] sm:$0xf]
          %v609 = vld [vmem:[%s602 + $0x18] sm:$0xf]
          %v610 = vld [vmem:[%s602 + $0x1c] sm:$0xf]
          %v611 = vld [vmem:[%s2] sm:$0xff]
          %613 = vset.pattern.permute.xlu0 0
          %614 = vperm.xlu0 %613, %v611
          %v615 = vpop.permute.xlu0 %614
          %v625 = vunpack.c.l.b16 %v603
          %v626 = vunpack.c.l.b16 %v604
          %v627 = vunpack.c.l.b16 %v605
          %v628 = vunpack.c.l.b16 %v606
          %v629 = vunpack.c.l.b16 %v607
          %v630 = vunpack.c.l.b16 %v608
          %v631 = vunpack.c.l.b16 %v609
          %v632 = vunpack.c.l.b16 %v610
          %v633 = vpack.c.b16 %v626, %v625
          %v634 = vpack.c.b16 %v628, %v627
          %v635 = vpack.c.b16 %v630, %v629
          %v636 = vpack.c.b16 %v632, %v631
          %v642 = vsel %vm512, %v601, 0
          %644 = vmatprep.subr.bf16.mxu0 0
          %645 = vmatpush1.bf16.msra.mxu0 %v633
          %646 = vmatprep.subr.bf16.mxu0 0
          %647 = vmatpush1.bf16.msra.mxu0 %v634
          %648 = vmatprep.subr.bf16.mxu0 0
          %649 = vmatpush1.bf16.msra.mxu0 %v635
          %650 = vmatprep.subr.bf16.mxu0 0
          %651 = vmatpush1.bf16.msra.mxu0 %v636
          %652 = vmatprep.subr.bf16.mxu0 0
          %653 = vmatpush1.bf16.msra.mxu0 0
          %654 = vmatprep.subr.bf16.mxu0 0
          %655 = vmatpush1.bf16.msra.mxu0 0
          %656 = vmatprep.subr.bf16.mxu0 0
          %657 = vmatpush1.bf16.msra.mxu0 0
          %658 = vmatprep.subr.bf16.mxu0 0
          %659 = vmatpush1.bf16.msra.mxu0 0
          %660 = vmatprep.subr.bf16.mxu0 0
          %661 = vmatpush1.bf16.msra.mxu0 0
          %662 = vmatprep.subr.bf16.mxu0 0
          %663 = vmatpush1.bf16.msra.mxu0 0
          %664 = vmatprep.subr.bf16.mxu0 0
          %665 = vmatpush1.bf16.msra.mxu0 0
          %666 = vmatprep.subr.bf16.mxu0 0
          %667 = vmatpush1.bf16.msra.mxu0 0
          %668 = vmatprep.subr.bf16.mxu0 0
          %669 = vmatpush1.bf16.msra.mxu0 0
          %670 = vmatprep.subr.bf16.mxu0 0
          %671 = vmatpush1.bf16.msra.mxu0 0
          %672 = vmatprep.subr.bf16.mxu0 0
          %673 = vmatpush1.bf16.msra.mxu0 0
          %674 = vmatprep.subr.bf16.mxu0 0
          %675 = vmatpush1.bf16.msra.mxu0 0
          %676 = vmatprep.mubr.bf16.mxu0 0
          %677 = vmatmul.mubr.bf16.gmra.mrb[0].mxu0 %v642
          %v678 = vpop.f32.mrb[0].mxu0
          %v679 = vadd.f32 %v615, %v678
          %v680 = vpop.f32.mrb[0].mxu0
          %v681 = vpop.f32.mrb[0].mxu0
          %v682 = vpop.f32.mrb[0].mxu0
          %683 = vdwg.mxu0
          %684 = vst.msk [vmem:[#allocation2 + $0x1] sm:$0x1] %vm556, %v679
          %v686 = vrot.slane %v679, 5
          %v687 = vrot.slane %v686, 4
          %688 = vrot.lane.b32.xlu0 %v687, 32
          %v689 = vpop.permute.xlu0 %688
          %691 = vst.msk [vmem:[#allocation2 + $0x1] sm:$0x1] %vm564, %v689
          %v692 = vrot.slane %v679, 6
          %v693 = vrot.slane %v692, 4
          %694 = vrot.lane.b32.xlu0 %v693, 64
          %v695 = vpop.permute.xlu0 %694
          %697 = vst.msk [vmem:[#allocation2 + $0x1] sm:$0x1] %vm571, %v695
          %v698 = vrot.slane %v679, 7
          %v699 = vrot.slane %v698, 4
          %700 = vrot.lane.b32.xlu0 %v699, 96
          %v701 = vpop.permute.xlu0 %700
          %703 = vst.msk [vmem:[#allocation2 + $0x1] sm:$0x1] %vm578, %v701
          %v704 = vcombine.high %v679, %v679
          %706 = vst.msk [vmem:[#allocation2 + $0x5] sm:$0x1] %vm556, %v704
          %v707 = vrot.slane %v704, 5
          %v708 = vrot.slane %v707, 4
          %709 = vrot.lane.b32.xlu0 %v708, 32
          %v710 = vpop.permute.xlu0 %709
          %712 = vst.msk [vmem:[#allocation2 + $0x5] sm:$0x1] %vm564, %v710
          %v713 = vrot.slane %v704, 6
          %v714 = vrot.slane %v713, 4
          %715 = vrot.lane.b32.xlu0 %v714, 64
          %v716 = vpop.permute.xlu0 %715
          %718 = vst.msk [vmem:[#allocation2 + $0x5] sm:$0x1] %vm571, %v716
          %v719 = vrot.slane %v704, 7
          %v720 = vrot.slane %v719, 4
          %721 = vrot.lane.b32.xlu0 %v720, 96
          %v722 = vpop.permute.xlu0 %721
          %724 = vst.msk [vmem:[#allocation2 + $0x5] sm:$0x1] %vm578, %v722
          %v725 = vld [vmem:[%s1] sm:$0xf]
          %s726 = scalar_lea.vmem %s0, 64
          %v727 = vld [vmem:[%s726] sm:$0xf]
          %v728 = vld [vmem:[%s726 + $0x4] sm:$0xf]
          %v729 = vld [vmem:[%s726 + $0x8] sm:$0xf]
          %v730 = vld [vmem:[%s726 + $0xc] sm:$0xf]
          %v731 = vld [vmem:[%s726 + $0x10] sm:$0xf]
          %v732 = vld [vmem:[%s726 + $0x14] sm:$0xf]
          %v733 = vld [vmem:[%s726 + $0x18] sm:$0xf]
          %v734 = vld [vmem:[%s726 + $0x1c] sm:$0xf]
          %v735 = vld [vmem:[%s2] sm:$0xff]
          %737 = vset.pattern.permute.xlu0 0
          %738 = vperm.xlu0 %737, %v735
          %v739 = vpop.permute.xlu0 %738
          %v749 = vunpack.c.l.b16 %v727
          %v750 = vunpack.c.l.b16 %v728
          %v751 = vunpack.c.l.b16 %v729
          %v752 = vunpack.c.l.b16 %v730
          %v753 = vunpack.c.l.b16 %v731
          %v754 = vunpack.c.l.b16 %v732
          %v755 = vunpack.c.l.b16 %v733
          %v756 = vunpack.c.l.b16 %v734
          %v757 = vpack.c.b16 %v750, %v749
          %v758 = vpack.c.b16 %v752, %v751
          %v759 = vpack.c.b16 %v754, %v753
          %v760 = vpack.c.b16 %v756, %v755
          %v766 = vsel %vm512, %v725, 0
          %768 = vmatprep.subr.bf16.mxu0 0
          %769 = vmatpush1.bf16.msra.mxu0 %v757
          %770 = vmatprep.subr.bf16.mxu0 0
          %771 = vmatpush1.bf16.msra.mxu0 %v758
          %772 = vmatprep.subr.bf16.mxu0 0
          %773 = vmatpush1.bf16.msra.mxu0 %v759
          %774 = vmatprep.subr.bf16.mxu0 0
          %775 = vmatpush1.bf16.msra.mxu0 %v760
          %776 = vmatprep.subr.bf16.mxu0 0
          %777 = vmatpush1.bf16.msra.mxu0 0
          %778 = vmatprep.subr.bf16.mxu0 0
          %779 = vmatpush1.bf16.msra.mxu0 0
          %780 = vmatprep.subr.bf16.mxu0 0
          %781 = vmatpush1.bf16.msra.mxu0 0
          %782 = vmatprep.subr.bf16.mxu0 0
          %783 = vmatpush1.bf16.msra.mxu0 0
          %784 = vmatprep.subr.bf16.mxu0 0
          %785 = vmatpush1.bf16.msra.mxu0 0
          %786 = vmatprep.subr.bf16.mxu0 0
          %787 = vmatpush1.bf16.msra.mxu0 0
          %788 = vmatprep.subr.bf16.mxu0 0
          %789 = vmatpush1.bf16.msra.mxu0 0
          %790 = vmatprep.subr.bf16.mxu0 0
          %791 = vmatpush1.bf16.msra.mxu0 0
          %792 = vmatprep.subr.bf16.mxu0 0
          %793 = vmatpush1.bf16.msra.mxu0 0
          %794 = vmatprep.subr.bf16.mxu0 0
          %795 = vmatpush1.bf16.msra.mxu0 0
          %796 = vmatprep.subr.bf16.mxu0 0
          %797 = vmatpush1.bf16.msra.mxu0 0
          %798 = vmatprep.subr.bf16.mxu0 0
          %799 = vmatpush1.bf16.msra.mxu0 0
          %800 = vmatprep.mubr.bf16.mxu0 0
          %801 = vmatmul.mubr.bf16.gmra.mrb[0].mxu0 %v766
          %v802 = vpop.f32.mrb[0].mxu0
          %v803 = vadd.f32 %v739, %v802
          %v804 = vpop.f32.mrb[0].mxu0
          %v805 = vpop.f32.mrb[0].mxu0
          %v806 = vpop.f32.mrb[0].mxu0
          %807 = vdwg.mxu0
          %808 = vst.msk [vmem:[#allocation2 + $0x2] sm:$0x1] %vm556, %v803
          %v810 = vrot.slane %v803, 5
          %v811 = vrot.slane %v810, 4
          %812 = vrot.lane.b32.xlu0 %v811, 32
          %v813 = vpop.permute.xlu0 %812
          %815 = vst.msk [vmem:[#allocation2 + $0x2] sm:$0x1] %vm564, %v813
          %v816 = vrot.slane %v803, 6
          %v817 = vrot.slane %v816, 4
          %818 = vrot.lane.b32.xlu0 %v817, 64
          %v819 = vpop.permute.xlu0 %818
          %821 = vst.msk [vmem:[#allocation2 + $0x2] sm:$0x1] %vm571, %v819
          %v822 = vrot.slane %v803, 7
          %v823 = vrot.slane %v822, 4
          %824 = vrot.lane.b32.xlu0 %v823, 96
          %v825 = vpop.permute.xlu0 %824
          %827 = vst.msk [vmem:[#allocation2 + $0x2] sm:$0x1] %vm578, %v825
          %v828 = vcombine.high %v803, %v803
          %830 = vst.msk [vmem:[#allocation2 + $0x6] sm:$0x1] %vm556, %v828
          %v831 = vrot.slane %v828, 5
          %v832 = vrot.slane %v831, 4
          %833 = vrot.lane.b32.xlu0 %v832, 32
          %v834 = vpop.permute.xlu0 %833
          %836 = vst.msk [vmem:[#allocation2 + $0x6] sm:$0x1] %vm564, %v834
          %v837 = vrot.slane %v828, 6
          %v838 = vrot.slane %v837, 4
          %839 = vrot.lane.b32.xlu0 %v838, 64
          %v840 = vpop.permute.xlu0 %839
          %842 = vst.msk [vmem:[#allocation2 + $0x6] sm:$0x1] %vm571, %v840
          %v843 = vrot.slane %v828, 7
          %v844 = vrot.slane %v843, 4
          %845 = vrot.lane.b32.xlu0 %v844, 96
          %v846 = vpop.permute.xlu0 %845
          %848 = vst.msk [vmem:[#allocation2 + $0x6] sm:$0x1] %vm578, %v846
          %v849 = vld [vmem:[%s1] sm:$0xf]
          %s850 = scalar_lea.vmem %s0, 96
          %v851 = vld [vmem:[%s850] sm:$0xf]
          %v852 = vld [vmem:[%s850 + $0x4] sm:$0xf]
          %v853 = vld [vmem:[%s850 + $0x8] sm:$0xf]
          %v854 = vld [vmem:[%s850 + $0xc] sm:$0xf]
          %v855 = vld [vmem:[%s850 + $0x10] sm:$0xf]
          %v856 = vld [vmem:[%s850 + $0x14] sm:$0xf]
          %v857 = vld [vmem:[%s850 + $0x18] sm:$0xf]
          %v858 = vld [vmem:[%s850 + $0x1c] sm:$0xf]
          %v859 = vld [vmem:[%s2] sm:$0xff]
          %861 = vset.pattern.permute.xlu0 0
          %862 = vperm.xlu0 %861, %v859
          %v863 = vpop.permute.xlu0 %862
          %v873 = vunpack.c.l.b16 %v851
          %v874 = vunpack.c.l.b16 %v852
          %v875 = vunpack.c.l.b16 %v853
          %v876 = vunpack.c.l.b16 %v854
          %v877 = vunpack.c.l.b16 %v855
          %v878 = vunpack.c.l.b16 %v856
          %v879 = vunpack.c.l.b16 %v857
          %v880 = vunpack.c.l.b16 %v858
          %v881 = vpack.c.b16 %v874, %v873
          %v882 = vpack.c.b16 %v876, %v875
          %v883 = vpack.c.b16 %v878, %v877
          %v884 = vpack.c.b16 %v880, %v879
          %v890 = vsel %vm512, %v849, 0
          %892 = vmatprep.subr.bf16.mxu0 0
          %893 = vmatpush1.bf16.msra.mxu0 %v881
          %894 = vmatprep.subr.bf16.mxu0 0
          %895 = vmatpush1.bf16.msra.mxu0 %v882
          %896 = vmatprep.subr.bf16.mxu0 0
          %897 = vmatpush1.bf16.msra.mxu0 %v883
          %898 = vmatprep.subr.bf16.mxu0 0
          %899 = vmatpush1.bf16.msra.mxu0 %v884
          %900 = vmatprep.subr.bf16.mxu0 0
          %901 = vmatpush1.bf16.msra.mxu0 0
          %902 = vmatprep.subr.bf16.mxu0 0
          %903 = vmatpush1.bf16.msra.mxu0 0
          %904 = vmatprep.subr.bf16.mxu0 0
          %905 = vmatpush1.bf16.msra.mxu0 0
          %906 = vmatprep.subr.bf16.mxu0 0
          %907 = vmatpush1.bf16.msra.mxu0 0
          %908 = vmatprep.subr.bf16.mxu0 0
          %909 = vmatpush1.bf16.msra.mxu0 0
          %910 = vmatprep.subr.bf16.mxu0 0
          %911 = vmatpush1.bf16.msra.mxu0 0
          %912 = vmatprep.subr.bf16.mxu0 0
          %913 = vmatpush1.bf16.msra.mxu0 0
          %914 = vmatprep.subr.bf16.mxu0 0
          %915 = vmatpush1.bf16.msra.mxu0 0
          %916 = vmatprep.subr.bf16.mxu0 0
          %917 = vmatpush1.bf16.msra.mxu0 0
          %918 = vmatprep.subr.bf16.mxu0 0
          %919 = vmatpush1.bf16.msra.mxu0 0
          %920 = vmatprep.subr.bf16.mxu0 0
          %921 = vmatpush1.bf16.msra.mxu0 0
          %922 = vmatprep.subr.bf16.mxu0 0
          %923 = vmatpush1.bf16.msra.mxu0 0
          %924 = vmatprep.mubr.bf16.mxu0 0
          %925 = vmatmul.mubr.bf16.gmra.mrb[0].mxu0 %v890
          %v926 = vpop.f32.mrb[0].mxu0
          %v927 = vadd.f32 %v863, %v926
          %v928 = vpop.f32.mrb[0].mxu0
          %v929 = vpop.f32.mrb[0].mxu0
          %v930 = vpop.f32.mrb[0].mxu0
          %931 = vdwg.mxu0
          %932 = vst.msk [vmem:[#allocation2 + $0x3] sm:$0x1] %vm556, %v927
          %v934 = vrot.slane %v927, 5
          %v935 = vrot.slane %v934, 4
          %936 = vrot.lane.b32.xlu0 %v935, 32
          %v937 = vpop.permute.xlu0 %936
          %939 = vst.msk [vmem:[#allocation2 + $0x3] sm:$0x1] %vm564, %v937
          %v940 = vrot.slane %v927, 6
          %v941 = vrot.slane %v940, 4
          %942 = vrot.lane.b32.xlu0 %v941, 64
          %v943 = vpop.permute.xlu0 %942
          %945 = vst.msk [vmem:[#allocation2 + $0x3] sm:$0x1] %vm571, %v943
          %v946 = vrot.slane %v927, 7
          %v947 = vrot.slane %v946, 4
          %948 = vrot.lane.b32.xlu0 %v947, 96
          %v949 = vpop.permute.xlu0 %948
          %951 = vst.msk [vmem:[#allocation2 + $0x3] sm:$0x1] %vm578, %v949
          %v952 = vcombine.high %v927, %v927
          %954 = vst.msk [vmem:[#allocation2 + $0x7] sm:$0x1] %vm556, %v952
          %v955 = vrot.slane %v952, 5
          %v956 = vrot.slane %v955, 4
          %957 = vrot.lane.b32.xlu0 %v956, 32
          %v958 = vpop.permute.xlu0 %957
          %960 = vst.msk [vmem:[#allocation2 + $0x7] sm:$0x1] %vm564, %v958
          %v961 = vrot.slane %v952, 6
          %v962 = vrot.slane %v961, 4
          %963 = vrot.lane.b32.xlu0 %v962, 64
          %v964 = vpop.permute.xlu0 %963
          %966 = vst.msk [vmem:[#allocation2 + $0x7] sm:$0x1] %vm571, %v964
          %v967 = vrot.slane %v952, 7
          %v968 = vrot.slane %v967, 4
          %969 = vrot.lane.b32.xlu0 %v968, 96
          %v970 = vpop.permute.xlu0 %969
          %972 = vst.msk [vmem:[#allocation2 + $0x7] sm:$0x1] %vm578, %v970
          %v973 = vld [vmem:[%s6] sm:$0x3]
          %v975 = vlaneseq
          %v976 = vshrl.u32 %v975, 7
          %v977 = vsub.s32 0, %v976
          %v978 = vrot.slane %v973, %v977
          %v979 = vlaneseq
          %v980 = vshrl.u32 %v979, 7
          %v981 = vsub.s32 1, %v980
          %v982 = vrot.slane %v973, %v981
          %v983 = vcombine.low %v978, %v982
          %vm985 = vcmask 1043456
          %vm986 = vcmask 424964
          %vm987 = vmor %vm986, %vm985
          %988 = vst.msk [vmem:[%s7] sm:$0xff] %vm987, %v983
        $region93: #{parsing_net_forward.1} parent=84 // pred_fallthru
          _
        %v989 = vld [vmem:[#allocation2] sm:$0xff]
        %v991 = vcombine.high %v989, %v989
        %v993 = vpack.c.bf16 %v989, %v989
        %v994 = vpack.c.bf16 %v991, %v991
        %v995 = vld [vmem:[%s425] sm:$0xf]
        %v996 = vld [vmem:[%s425 + $0x4] sm:$0xf]
        %v997 = vld [vmem:[%s425 + $0x8] sm:$0xf]
        %v998 = vld [vmem:[%s425 + $0xc] sm:$0xf]
        %v999 = vld [vmem:[%s425 + $0x10] sm:$0xf]
        %v1000 = vld [vmem:[%s425 + $0x14] sm:$0xf]
        %v1001 = vld [vmem:[%s425 + $0x18] sm:$0xf]
        %v1002 = vld [vmem:[%s425 + $0x1c] sm:$0xf]
        %v1003 = vld [vmem:[%s425 + $0x20] sm:$0xf]
        %v1004 = vld [vmem:[%s425 + $0x24] sm:$0xf]
        %v1005 = vld [vmem:[%s425 + $0x28] sm:$0xf]
        %v1006 = vld [vmem:[%s425 + $0x2c] sm:$0xf]
        %v1007 = vld [vmem:[%s425 + $0x30] sm:$0xf]
        %v1008 = vld [vmem:[%s425 + $0x34] sm:$0xf]
        %v1009 = vld [vmem:[%s425 + $0x38] sm:$0xf]
        %v1010 = vld [vmem:[%s425 + $0x3c] sm:$0xf]
        %v1011 = vld [vmem:[%s425 + $0x40] sm:$0xf]
        %v1012 = vld [vmem:[%s425 + $0x44] sm:$0xf]
        %v1013 = vld [vmem:[%s425 + $0x48] sm:$0xf]
        %v1014 = vld [vmem:[%s425 + $0x4c] sm:$0xf]
        %v1015 = vld [vmem:[%s425 + $0x50] sm:$0xf]
        %v1016 = vld [vmem:[%s425 + $0x54] sm:$0xf]
        %v1017 = vld [vmem:[%s425 + $0x58] sm:$0xf]
        %v1018 = vld [vmem:[%s425 + $0x5c] sm:$0xf]
        %v1019 = vld [vmem:[%s425 + $0x60] sm:$0xf]
        %v1020 = vld [vmem:[%s425 + $0x64] sm:$0xf]
        %v1021 = vld [vmem:[%s425 + $0x68] sm:$0xf]
        %v1022 = vld [vmem:[%s425 + $0x6c] sm:$0xf]
        %v1023 = vld [vmem:[%s425 + $0x70] sm:$0xf]
        %v1024 = vld [vmem:[%s425 + $0x74] sm:$0xf]
        %v1025 = vld [vmem:[%s425 + $0x78] sm:$0xf]
        %v1026 = vld [vmem:[%s425 + $0x7c] sm:$0xf]
        %v1027 = vld [vmem:[%s460] sm:$0x1]
        %v1029 = vlaneseq
        %v1030 = vshrl.u32 %v1029, 7
        %v1031 = vsub.s32 0, %v1030
        %v1032 = vrot.slane %v1027, %v1031
        %v1066 = vunpack.c.l.b16 %v995
        %v1067 = vunpack.c.l.b16 %v996
        %v1068 = vunpack.c.l.b16 %v997
        %v1069 = vunpack.c.l.b16 %v998
        %v1070 = vunpack.c.l.b16 %v999
        %v1071 = vunpack.c.l.b16 %v1000
        %v1072 = vunpack.c.l.b16 %v1001
        %v1073 = vunpack.c.l.b16 %v1002
        %v1074 = vunpack.c.l.b16 %v1003
        %v1075 = vunpack.c.l.b16 %v1004
        %v1076 = vunpack.c.l.b16 %v1005
        %v1077 = vunpack.c.l.b16 %v1006
        %v1078 = vunpack.c.l.b16 %v1007
        %v1079 = vunpack.c.l.b16 %v1008
        %v1080 = vunpack.c.l.b16 %v1009
        %v1081 = vunpack.c.l.b16 %v1010
        %v1082 = vunpack.c.l.b16 %v1011
        %v1083 = vunpack.c.l.b16 %v1012
        %v1084 = vunpack.c.l.b16 %v1013
        %v1085 = vunpack.c.l.b16 %v1014
        %v1086 = vunpack.c.l.b16 %v1015
        %v1087 = vunpack.c.l.b16 %v1016
        %v1088 = vunpack.c.l.b16 %v1017
        %v1089 = vunpack.c.l.b16 %v1018
        %v1090 = vunpack.c.l.b16 %v1019
        %v1091 = vunpack.c.l.b16 %v1020
        %v1092 = vunpack.c.l.b16 %v1021
        %v1093 = vunpack.c.l.b16 %v1022
        %v1094 = vunpack.c.l.b16 %v1023
        %v1095 = vunpack.c.l.b16 %v1024
        %v1096 = vunpack.c.l.b16 %v1025
        %v1097 = vunpack.c.l.b16 %v1026
        %v1098 = vpack.c.b16 %v1067, %v1066
        %v1099 = vpack.c.b16 %v1069, %v1068
        %v1100 = vpack.c.b16 %v1071, %v1070
        %v1101 = vpack.c.b16 %v1073, %v1072
        %v1102 = vpack.c.b16 %v1075, %v1074
        %v1103 = vpack.c.b16 %v1077, %v1076
        %v1104 = vpack.c.b16 %v1079, %v1078
        %v1105 = vpack.c.b16 %v1081, %v1080
        %v1106 = vpack.c.b16 %v1083, %v1082
        %v1107 = vpack.c.b16 %v1085, %v1084
        %v1108 = vpack.c.b16 %v1087, %v1086
        %v1109 = vpack.c.b16 %v1089, %v1088
        %v1110 = vpack.c.b16 %v1091, %v1090
        %v1111 = vpack.c.b16 %v1093, %v1092
        %v1112 = vpack.c.b16 %v1095, %v1094
        %v1113 = vpack.c.b16 %v1097, %v1096
        %1130 = vmatprep.subr.bf16.mxu0 0
        %1131 = vmatpush1.bf16.msra.mxu0 %v1098
        %1132 = vmatprep.subr.bf16.mxu0 0
        %1133 = vmatpush1.bf16.msra.mxu0 %v1099
        %1134 = vmatprep.subr.bf16.mxu0 0
        %1135 = vmatpush1.bf16.msra.mxu0 %v1100
        %1136 = vmatprep.subr.bf16.mxu0 0
        %1137 = vmatpush1.bf16.msra.mxu0 %v1101
        %1138 = vmatprep.subr.bf16.mxu0 0
        %1139 = vmatpush1.bf16.msra.mxu0 %v1102
        %1140 = vmatprep.subr.bf16.mxu0 0
        %1141 = vmatpush1.bf16.msra.mxu0 %v1103
        %1142 = vmatprep.subr.bf16.mxu0 0
        %1143 = vmatpush1.bf16.msra.mxu0 %v1104
        %1144 = vmatprep.subr.bf16.mxu0 0
        %1145 = vmatpush1.bf16.msra.mxu0 %v1105
        %1146 = vmatprep.subr.bf16.mxu0 0
        %1147 = vmatpush1.bf16.msra.mxu0 %v1106
        %1148 = vmatprep.subr.bf16.mxu0 0
        %1149 = vmatpush1.bf16.msra.mxu0 %v1107
        %1150 = vmatprep.subr.bf16.mxu0 0
        %1151 = vmatpush1.bf16.msra.mxu0 %v1108
        %1152 = vmatprep.subr.bf16.mxu0 0
        %1153 = vmatpush1.bf16.msra.mxu0 %v1109
        %1154 = vmatprep.subr.bf16.mxu0 0
        %1155 = vmatpush1.bf16.msra.mxu0 %v1110
        %1156 = vmatprep.subr.bf16.mxu0 0
        %1157 = vmatpush1.bf16.msra.mxu0 %v1111
        %1158 = vmatprep.subr.bf16.mxu0 0
        %1159 = vmatpush1.bf16.msra.mxu0 %v1112
        %1160 = vmatprep.subr.bf16.mxu0 0
        %1161 = vmatpush1.bf16.msra.mxu0 %v1113
        %1162 = vmatprep.mubr.bf16.mxu0 %v994
        %1163 = vmatmul.mubr.bf16.gmra.mrb[0].mxu0 %v993
        %v1164 = vpop.f32.mrb[0].mxu0
        %v1165 = vadd.f32 %v1032, %v1164
        %v1166 = vpop.f32.mrb[0].mxu0
        %v1167 = vpop.f32.mrb[0].mxu0
        %v1168 = vpop.f32.mrb[0].mxu0
        %1169 = vdwg.mxu0
        %v1170 = vmax.f32 %v1165, 0.0
        %v1171 = vpack.c.bf16 %v1170, %v1170
        %v1172 = vld [vmem:[%s7] sm:$0xff]
        %v1173 = vld [vmem:[%s466] sm:$0xff]
        %v1174 = vld [vmem:[%s466 + $0x8] sm:$0xff]
        %v1175 = vld [vmem:[%s466 + $0x10] sm:$0xff]
        %v1176 = vld [vmem:[%s466 + $0x18] sm:$0xff]
        %v1177 = vld [vmem:[%s466 + $0x20] sm:$0xff]
        %v1178 = vld [vmem:[%s466 + $0x28] sm:$0xff]
        %v1179 = vld [vmem:[%s466 + $0x30] sm:$0xff]
        %v1180 = vld [vmem:[%s466 + $0x38] sm:$0xff]
        %v1181 = vld [vmem:[%s466 + $0x40] sm:$0xff]
        %v1182 = vld [vmem:[%s466 + $0x48] sm:$0xff]
        %v1183 = vld [vmem:[%s466 + $0x50] sm:$0xff]
        %v1184 = vld [vmem:[%s466 + $0x58] sm:$0xff]
        %v1185 = vld [vmem:[%s466 + $0x60] sm:$0xff]
        %v1186 = vld [vmem:[%s466 + $0x68] sm:$0xff]
        %v1187 = vld [vmem:[%s466 + $0x70] sm:$0xff]
        %v1188 = vld [vmem:[%s466 + $0x78] sm:$0xff]
        %v1205 = vunpack.c.l.b16 %v1173
        %v1206 = vunpack.c.h.b16 %v1173
        %v1207 = vunpack.c.l.b16 %v1174
        %v1208 = vunpack.c.h.b16 %v1174
        %v1209 = vunpack.c.l.b16 %v1175
        %v1210 = vunpack.c.h.b16 %v1175
        %v1211 = vunpack.c.l.b16 %v1176
        %v1212 = vunpack.c.h.b16 %v1176
        %v1213 = vunpack.c.l.b16 %v1177
        %v1214 = vunpack.c.h.b16 %v1177
        %v1215 = vunpack.c.l.b16 %v1178
        %v1216 = vunpack.c.h.b16 %v1178
        %v1217 = vunpack.c.l.b16 %v1179
        %v1218 = vunpack.c.h.b16 %v1179
        %v1219 = vunpack.c.l.b16 %v1180
        %v1220 = vunpack.c.h.b16 %v1180
        %v1221 = vunpack.c.l.b16 %v1181
        %v1222 = vunpack.c.h.b16 %v1181
        %v1223 = vunpack.c.l.b16 %v1182
        %v1224 = vunpack.c.h.b16 %v1182
        %v1225 = vunpack.c.l.b16 %v1183
        %v1226 = vunpack.c.h.b16 %v1183
        %v1227 = vunpack.c.l.b16 %v1184
        %v1228 = vunpack.c.h.b16 %v1184
        %v1229 = vunpack.c.l.b16 %v1185
        %v1230 = vunpack.c.h.b16 %v1185
        %v1231 = vunpack.c.l.b16 %v1186
        %v1232 = vunpack.c.h.b16 %v1186
        %v1233 = vunpack.c.l.b16 %v1187
        %v1234 = vunpack.c.h.b16 %v1187
        %v1235 = vunpack.c.l.b16 %v1188
        %v1236 = vunpack.c.h.b16 %v1188
        %v1237 = vpack.c.b16 %v1207, %v1205
        %v1238 = vpack.c.b16 %v1208, %v1206
        %v1239 = vpack.c.b16 %v1211, %v1209
        %v1240 = vpack.c.b16 %v1212, %v1210
        %v1241 = vpack.c.b16 %v1215, %v1213
        %v1242 = vpack.c.b16 %v1216, %v1214
        %v1243 = vpack.c.b16 %v1219, %v1217
        %v1244 = vpack.c.b16 %v1220, %v1218
        %v1245 = vpack.c.b16 %v1223, %v1221
        %v1246 = vpack.c.b16 %v1224, %v1222
        %v1247 = vpack.c.b16 %v1227, %v1225
        %v1248 = vpack.c.b16 %v1228, %v1226
        %v1249 = vpack.c.b16 %v1231, %v1229
        %v1250 = vpack.c.b16 %v1232, %v1230
        %v1251 = vpack.c.b16 %v1235, %v1233
        %v1252 = vpack.c.b16 %v1236, %v1234
        %1269 = vmatprep.subr.bf16.mxu0 %v1238
        %1270 = vmatpush1.bf16.msra.mxu0 %v1237
        %1271 = vmatprep.subr.bf16.mxu0 %v1240
        %1272 = vmatpush1.bf16.msra.mxu0 %v1239
        %1273 = vmatprep.subr.bf16.mxu0 %v1242
        %1274 = vmatpush1.bf16.msra.mxu0 %v1241
        %1275 = vmatprep.subr.bf16.mxu0 %v1244
        %1276 = vmatpush1.bf16.msra.mxu0 %v1243
        %1277 = vmatprep.subr.bf16.mxu0 %v1246
        %1278 = vmatpush1.bf16.msra.mxu0 %v1245
        %1279 = vmatprep.subr.bf16.mxu0 %v1248
        %1280 = vmatpush1.bf16.msra.mxu0 %v1247
        %1281 = vmatprep.subr.bf16.mxu0 %v1250
        %1282 = vmatpush1.bf16.msra.mxu0 %v1249
        %1283 = vmatprep.subr.bf16.mxu0 %v1252
        %1284 = vmatpush1.bf16.msra.mxu0 %v1251
        %1285 = vmatprep.subr.bf16.mxu0 0
        %1286 = vmatpush1.bf16.msra.mxu0 0
        %1287 = vmatprep.subr.bf16.mxu0 0
        %1288 = vmatpush1.bf16.msra.mxu0 0
        %1289 = vmatprep.subr.bf16.mxu0 0
        %1290 = vmatpush1.bf16.msra.mxu0 0
        %1291 = vmatprep.subr.bf16.mxu0 0
        %1292 = vmatpush1.bf16.msra.mxu0 0
        %1293 = vmatprep.subr.bf16.mxu0 0
        %1294 = vmatpush1.bf16.msra.mxu0 0
        %1295 = vmatprep.subr.bf16.mxu0 0
        %1296 = vmatpush1.bf16.msra.mxu0 0
        %1297 = vmatprep.subr.bf16.mxu0 0
        %1298 = vmatpush1.bf16.msra.mxu0 0
        %1299 = vmatprep.subr.bf16.mxu0 0
        %1300 = vmatpush1.bf16.msra.mxu0 0
        %1301 = vmatprep.mubr.bf16.mxu0 0
        %1302 = vmatmul.mubr.bf16.gmra.mrb[0].mxu0 %v1171
        %v1303 = vpop.f32.mrb[0].mxu0
        %v1304 = vadd.f32 0.0, %v1303
        %v1305 = vpop.f32.mrb[0].mxu0
        %v1306 = vadd.f32 0.0, %v1305
        %v1307 = vpop.f32.mrb[0].mxu0
        %v1308 = vpop.f32.mrb[0].mxu0
        %1309 = vdwg.mxu0
        %v1312 = vcombine.low %v1304, %v1306
        %v1314 = vadd.f32 %v1172, %v1312
        %vm1315 = vcmask 1043456
        %vm1316 = vcmask 424964
        %vm1317 = vmor %vm1316, %vm1315
        %1318 = vst.msk [vmem:[%s7] sm:$0xff] %vm1317, %v1314
        // Predicated region
        $region94: #{parsing_net_forward.1} parent=84 // pred_check
          %p1319 = pneg %p193
        $region95: #{parsing_net_forward.1} parent=84 // pred_check_branch
          %1321 = sbr.rel (%p1319) target = $region97
        $region96: #{parsing_net_forward.1} parent=84 // pred_region
          _
        $region97: #{parsing_net_forward.1} parent=84 // pred_fallthru
          _
        // Predicated region
        $region98: #{parsing_net_forward.1} parent=84 // pred_check
          %p1322 = pneg %p193
        $region99: #{parsing_net_forward.1} parent=84 // pred_check_branch
          %1324 = sbr.rel (%p1322) target = $region101
        $region100: #{parsing_net_forward.1} parent=84 // pred_region
          _
        $region101: #{parsing_net_forward.1} parent=84 // pred_fallthru
          _
      $region85: #{parsing_net_forward.1} parent=5 // pred_fallthru
        _
      %p1325 = scmp.le.s32.totalorder 2, %s13
      // Predicated region
      $region102: #{parsing_net_forward.1} parent=5 // pred_check
        %p1326 = pneg %p1325
      $region103: #{parsing_net_forward.1} parent=5 // pred_check_branch
        %1328 = sbr.rel (%p1326) target = $region105
      $region104: #{parsing_net_forward.1} parent=5 // pred_region
        %s1329 = ssub.s32 %s13, 2
      $region105: #{parsing_net_forward.1} parent=5 // pred_fallthru
        _
    $region6: #{parsing_net_forward.1} parent=1 // loop_footer
      %s17 = sadd.s32 1, %s13
    $region7: #{parsing_net_forward.1} parent=1 // loop_footer_branch
      %12 = sbr.rel target = $region3
    $region8: #{parsing_net_forward.1} parent=1 // loop_exit
      _

</llo_original>
